<compile_context>
chip_gen: v5e
topology: v5e:2x2
jax: 0.10.0
libtpu: 0.0.40
codegen_flags: <defaults>
</compile_context>

<pallas_src>
import jax
import jax.numpy as jnp
from jax.experimental import pallas as pl
from jax.experimental.pallas import tpu as pltpu

HIDDEN = 400          # logical width from the PyTorch module
HPAD = 512            # padded width (multiple of 128) used inside the kernel


def _mlp_kernel(x_ref, z_ref,
                w1x_ref, w1z_ref, b1_ref,
                w2_ref, b2_ref,
                w3_ref, b3_ref,
                w4_ref, b4_ref,
                o_ref):
    # --- Layer 1: fused concat  (x @ W1x + z @ W1z + b1), ReLU ------------
    x = x_ref[...].astype(jnp.bfloat16)
    z = z_ref[...].astype(jnp.bfloat16)
    h = (jnp.dot(x, w1x_ref[...], preferred_element_type=jnp.float32)
         + jnp.dot(z, w1z_ref[...], preferred_element_type=jnp.float32)
         + b1_ref[...])
    h = jnp.maximum(h, 0.0)

    # --- Layer 2: Linear(512->512) + ReLU (bf16 MXU, f32 accumulate) ------
    h = jnp.dot(h.astype(jnp.bfloat16), w2_ref[...],
                preferred_element_type=jnp.float32) + b2_ref[...]
    h = jnp.maximum(h, 0.0)

    # --- Layer 3: Linear(512->512) + ReLU ---------------------------------
    h = jnp.dot(h.astype(jnp.bfloat16), w3_ref[...],
                preferred_element_type=jnp.float32) + b3_ref[...]
    h = jnp.maximum(h, 0.0)

    # --- Layer 4: Linear(512->1) as VPU multiply + lane reduce ------------
    # (avoids an N=1 MXU pass; padded weight rows are zero so they are inert)
    o_ref[...] = jnp.sum(h * w4_ref[...], axis=-1, keepdims=True) + b4_ref[...]


def _pad_to(a, shape):
    return jnp.pad(a, [(0, t - s) for s, t in zip(a.shape, shape)])


def prepare_params(params, x_dim):
    """One-time conversion of f32 module params -> kernel params
    (split W1, pad 400->512, weights in bf16, biases / w4 row in f32)."""
    (w1, b1, w2, b2, w3, b3, w4, b4) = params
    z_dim = w1.shape[0] - x_dim
    w1x = _pad_to(w1[:x_dim], (x_dim, HPAD)).astype(jnp.bfloat16)
    w1z = _pad_to(w1[x_dim:], (z_dim, HPAD)).astype(jnp.bfloat16)
    b1p = _pad_to(b1, (1, HPAD))
    w2p = _pad_to(w2, (HPAD, HPAD)).astype(jnp.bfloat16)
    b2p = _pad_to(b2, (1, HPAD))
    w3p = _pad_to(w3, (HPAD, HPAD)).astype(jnp.bfloat16)
    b3p = _pad_to(b3, (1, HPAD))
    w4p = _pad_to(w4.T, (1, HPAD))            # (1, 512) f32 row for VPU reduce
    return (w1x, w1z, b1p, w2p, b2p, w3p, b3p, w4p, b4)


def t_forward(x, z, kparams):
    """Pallas implementation of T.forward(x, z) using prepared params."""
    (w1x, w1z, b1, w2, b2, w3, b3, w4, b4) = kparams
    B = x.shape[0]

    full = lambda shape: pl.BlockSpec(shape, lambda: (0,) * len(shape))
    in_specs = [
        full(x.shape), full(z.shape),
        full(w1x.shape), full(w1z.shape), full(b1.shape),
        full(w2.shape), full(b2.shape),
        full(w3.shape), full(b3.shape),
        full(w4.shape), full(b4.shape),
    ]
    out_spec = full((B, 1))

    return pl.pallas_call(
        _mlp_kernel,
        out_shape=jax.ShapeDtypeStruct((B, 1), jnp.float32),
        grid=(),
        in_specs=in_specs,
        out_specs=out_spec,
    )(x, z, w1x, w1z, b1, w2, b2, w3, b3, w4, b4)


def init_params(key, x_dim, z_dim):
    """Deterministic synthetic f32 parameters (shapes from the module __init__).
    Weights stored as (in_features, out_features), biases as (1, out_features)."""
    d_in = x_dim + z_dim
    dims = [(d_in, HIDDEN), (HIDDEN, HIDDEN), (HIDDEN, HIDDEN), (HIDDEN, 1)]
    params = []
    for (fi, fo) in dims:
        kw, kb, key = jax.random.split(key, 3)
        bound = 1.0 / (fi ** 0.5)
        w = jax.random.uniform(kw, (fi, fo), jnp.float32, -bound, bound)
        b = jax.random.uniform(kb, (1, fo), jnp.float32, -bound, bound)
        params += [w, b]
    return tuple(params)


def t_forward_ref(x, z, params):
    """Pure-JAX f32 reference with the original module semantics."""
    (w1, b1, w2, b2, w3, b3, w4, b4) = params
    h = jnp.concatenate([x, z], axis=-1)
    h = jnp.maximum(h @ w1 + b1, 0.0)
    h = jnp.maximum(h @ w2 + b2, 0.0)
    h = jnp.maximum(h @ w3 + b3, 0.0)
    return h @ w4 + b4


if __name__ == "__main__":
    B, x_dim, z_dim = 8, 16, 8
    key = jax.random.PRNGKey(0)
    kx, kz, kp = jax.random.split(key, 3)
    x = jax.random.normal(kx, (B, x_dim), jnp.float32)
    z = jax.random.normal(kz, (B, z_dim), jnp.float32)
    params = init_params(kp, x_dim, z_dim)
    kparams = prepare_params(params, x_dim)   # one-time: split/pad/bf16-cast

    out = jax.block_until_ready(t_forward(x, z, kparams))
    ref = t_forward_ref(x, z, params)
    assert out.shape == (B, 1)
    # bf16 weight/activation storage => relaxed tolerance vs the f32 reference
    assert jnp.allclose(out, ref, atol=2e-2, rtol=2e-2), \
        float(jnp.max(jnp.abs(out - ref)))
    print("KERNEL_OK")
</pallas_src>

<mosaic_0001>
module attributes {stable_mosaic.version = 11 : i64} {
  func.func @_mlp_kernel(%arg0: memref<8x16xf32, #tpu.memory_space<vmem>>, %arg1: memref<8x8xf32, #tpu.memory_space<vmem>>, %arg2: memref<16x512xbf16, #tpu.memory_space<vmem>>, %arg3: memref<8x512xbf16, #tpu.memory_space<vmem>>, %arg4: memref<1x512xf32, #tpu.memory_space<vmem>>, %arg5: memref<512x512xbf16, #tpu.memory_space<vmem>>, %arg6: memref<1x512xf32, #tpu.memory_space<vmem>>, %arg7: memref<512x512xbf16, #tpu.memory_space<vmem>>, %arg8: memref<1x512xf32, #tpu.memory_space<vmem>>, %arg9: memref<1x512xf32, #tpu.memory_space<vmem>>, %arg10: memref<1x1xf32, #tpu.memory_space<vmem>>, %arg11: memref<8x1xf32, #tpu.memory_space<vmem>>) attributes {dimension_semantics = [], scalar_prefetch = 0 : i64, scratch_operands = 0 : i64, tpu.core_type = #tpu.core_type<tc>} {
    %c0 = arith.constant 0 : index
    %c0_0 = arith.constant 0 : index
    %0 = vector.load %arg0[%c0, %c0_0] : memref<8x16xf32, #tpu.memory_space<vmem>>, vector<8x16xf32>
    %1 = arith.truncf %0 : vector<8x16xf32> to vector<8x16xbf16>
    %c0_1 = arith.constant 0 : index
    %c0_2 = arith.constant 0 : index
    %2 = vector.load %arg1[%c0_1, %c0_2] : memref<8x8xf32, #tpu.memory_space<vmem>>, vector<8x8xf32>
    %3 = arith.truncf %2 : vector<8x8xf32> to vector<8x8xbf16>
    %c0_3 = arith.constant 0 : index
    %c0_4 = arith.constant 0 : index
    %4 = vector.load %arg2[%c0_3, %c0_4] : memref<16x512xbf16, #tpu.memory_space<vmem>>, vector<16x512xbf16>
    %cst = arith.constant dense<0.000000e+00> : vector<8x512xf32>
    %5 = tpu.matmul %1, %4, %cst {dimension_numbers = #tpu.dot_dimension_numbers<[1], [0], [0], [1], [0, 0, 1, 1], [], []>} : vector<8x16xbf16>, vector<16x512xbf16>, vector<8x512xf32> -> vector<8x512xf32>
    %c0_5 = arith.constant 0 : index
    %c0_6 = arith.constant 0 : index
    %6 = vector.load %arg3[%c0_5, %c0_6] : memref<8x512xbf16, #tpu.memory_space<vmem>>, vector<8x512xbf16>
    %cst_7 = arith.constant dense<0.000000e+00> : vector<8x512xf32>
    %7 = tpu.matmul %3, %6, %cst_7 {dimension_numbers = #tpu.dot_dimension_numbers<[1], [0], [0], [1], [0, 0, 1, 1], [], []>} : vector<8x8xbf16>, vector<8x512xbf16>, vector<8x512xf32> -> vector<8x512xf32>
    %8 = arith.addf %5, %7 : vector<8x512xf32>
    %c0_8 = arith.constant 0 : index
    %c0_9 = arith.constant 0 : index
    %9 = vector.load %arg4[%c0_8, %c0_9] : memref<1x512xf32, #tpu.memory_space<vmem>>, vector<1x512xf32>
    %10 = vector.broadcast %9 : vector<1x512xf32> to vector<8x512xf32>
    %11 = arith.addf %8, %10 : vector<8x512xf32>
    %cst_10 = arith.constant 0.000000e+00 : f32
    %12 = vector.broadcast %cst_10 : f32 to vector<8x512xf32>
    %13 = arith.maximumf %11, %12 : vector<8x512xf32>
    %14 = arith.truncf %13 : vector<8x512xf32> to vector<8x512xbf16>
    %c0_11 = arith.constant 0 : index
    %c0_12 = arith.constant 0 : index
    %15 = vector.load %arg5[%c0_11, %c0_12] : memref<512x512xbf16, #tpu.memory_space<vmem>>, vector<512x512xbf16>
    %cst_13 = arith.constant dense<0.000000e+00> : vector<8x512xf32>
    %16 = tpu.matmul %14, %15, %cst_13 {dimension_numbers = #tpu.dot_dimension_numbers<[1], [0], [0], [1], [0, 0, 1, 1], [], []>} : vector<8x512xbf16>, vector<512x512xbf16>, vector<8x512xf32> -> vector<8x512xf32>
    %c0_14 = arith.constant 0 : index
    %c0_15 = arith.constant 0 : index
    %17 = vector.load %arg6[%c0_14, %c0_15] : memref<1x512xf32, #tpu.memory_space<vmem>>, vector<1x512xf32>
    %18 = vector.broadcast %17 : vector<1x512xf32> to vector<8x512xf32>
    %19 = arith.addf %16, %18 : vector<8x512xf32>
    %cst_16 = arith.constant 0.000000e+00 : f32
    %20 = vector.broadcast %cst_16 : f32 to vector<8x512xf32>
    %21 = arith.maximumf %19, %20 : vector<8x512xf32>
    %22 = arith.truncf %21 : vector<8x512xf32> to vector<8x512xbf16>
    %c0_17 = arith.constant 0 : index
    %c0_18 = arith.constant 0 : index
    %23 = vector.load %arg7[%c0_17, %c0_18] : memref<512x512xbf16, #tpu.memory_space<vmem>>, vector<512x512xbf16>
    %cst_19 = arith.constant dense<0.000000e+00> : vector<8x512xf32>
    %24 = tpu.matmul %22, %23, %cst_19 {dimension_numbers = #tpu.dot_dimension_numbers<[1], [0], [0], [1], [0, 0, 1, 1], [], []>} : vector<8x512xbf16>, vector<512x512xbf16>, vector<8x512xf32> -> vector<8x512xf32>
    %c0_20 = arith.constant 0 : index
    %c0_21 = arith.constant 0 : index
    %25 = vector.load %arg8[%c0_20, %c0_21] : memref<1x512xf32, #tpu.memory_space<vmem>>, vector<1x512xf32>
    %26 = vector.broadcast %25 : vector<1x512xf32> to vector<8x512xf32>
    %27 = arith.addf %24, %26 : vector<8x512xf32>
    %cst_22 = arith.constant 0.000000e+00 : f32
    %28 = vector.broadcast %cst_22 : f32 to vector<8x512xf32>
    %29 = arith.maximumf %27, %28 : vector<8x512xf32>
    %c0_23 = arith.constant 0 : index
    %c0_24 = arith.constant 0 : index
    %30 = vector.load %arg9[%c0_23, %c0_24] : memref<1x512xf32, #tpu.memory_space<vmem>>, vector<1x512xf32>
    %31 = vector.broadcast %30 : vector<1x512xf32> to vector<8x512xf32>
    %32 = arith.mulf %29, %31 : vector<8x512xf32>
    %cst_25 = arith.constant dense<0.000000e+00> : vector<8xf32>
    %33 = vector.multi_reduction <add>, %32, %cst_25 [1] : vector<8x512xf32> to vector<8xf32>
    %34 = vector.shape_cast %33 : vector<8xf32> to vector<8x1xf32>
    %c0_26 = arith.constant 0 : index
    %c0_27 = arith.constant 0 : index
    %35 = vector.load %arg10[%c0_26, %c0_27] : memref<1x1xf32, #tpu.memory_space<vmem>>, vector<1x1xf32>
    %36 = vector.broadcast %35 : vector<1x1xf32> to vector<8x1xf32>
    %37 = arith.addf %34, %36 : vector<8x1xf32>
    %c0_28 = arith.constant 0 : index
    %c0_29 = arith.constant 0 : index
    %38 = vector.load %arg11[%c0_28, %c0_29] : memref<8x1xf32, #tpu.memory_space<vmem>>, vector<8x1xf32>
    tpu.vector_store %arg11[%c0_28, %c0_29], %37 {strides = array<i32>} : memref<8x1xf32, #tpu.memory_space<vmem>>, vector<8x1xf32>,
    return
  }
}

</mosaic_0001>

<llo_original>
// kernel: tpu_custom_call.1
$region0: #{tpu_custom_call.1}
  #allocation0 [shape = 'u32[]', space=smem, size = 0x4, offset = 0x4, fixed_abs, tag = 'smem constant byte address 0x4 - core index']
  #allocation1 [shape = 'u32[72,128]{1,0:T(1,128)}', space=vmem, size = 0x9000, scoped, tag = 'internal scratch']
  #allocation2 [shape = 'f32[1,1]{1,0:T(1,128)S(1)}', space=vmem, size = 0x200, scoped, tag = 'scoped memory for tpu_custom_call.1']
  %s0 = inlined_call_operand.hbm [shape: f32[8,16], index: 0, kind: input, shape index: {}]
  %s1 = inlined_call_operand.hbm [shape: f32[8,8], index: 1, kind: input, shape index: {}]
  %s2 = inlined_call_operand.hbm [shape: bf16[16,512], index: 2, kind: input, shape index: {}]
  %s3 = inlined_call_operand.hbm [shape: bf16[8,512], index: 3, kind: input, shape index: {}]
  %s4 = inlined_call_operand.vmem [shape: f32[1,512], index: 4, kind: input, shape index: {}]
  %s5 = inlined_call_operand.hbm [shape: bf16[512,512], index: 5, kind: input, shape index: {}]
  %s6 = inlined_call_operand.hbm [shape: f32[1,512], index: 6, kind: input, shape index: {}]
  %s7 = inlined_call_operand.hbm [shape: bf16[512,512], index: 7, kind: input, shape index: {}]
  %s8 = inlined_call_operand.vmem [shape: f32[1,512], index: 8, kind: input, shape index: {}]
  %s9 = inlined_call_operand.hbm [shape: f32[1,512], index: 9, kind: input, shape index: {}]
  %s10 = inlined_call_operand.<no memory space> [shape: f32[1,1], index: 10, kind: input, shape index: {}]
  %s11 = inlined_call_operand.vmem [shape: f32[8,1], index: 11, kind: output, shape index: {}]
  %s12 = sld [smem:[#allocation0]]
  $region86: #{tpu_custom_call.1} parent=0
    _
  %s14 = ssub.s32 1, %s12
  %s15 = scalar_select 0, %s14, %s12
  %v16 = vstv %s10
  %17 = vst [vmem:[#allocation2] sm:$0x1] %v16
  $region1: #{tpu_custom_call.1} parent=0
    #allocation3 [shape = 'u8[4096]{0}', space=vmem, size = 0x1000, scoped, tag = 'input window, operand 0, single buffered']
    #allocation4 [shape = 's32[1]{0}', space=sflag, size = 0x4, scoped, tag = 'scoped memory for tpu_custom_call.1']
    #allocation5 [shape = 'u8[4096]{0}', space=vmem, size = 0x1000, scoped, tag = 'input window, operand 1, single buffered']
    #allocation6 [shape = 's32[1]{0}', space=sflag, size = 0x4, scoped, tag = 'scoped memory for tpu_custom_call.1']
    #allocation7 [shape = 'u8[16384]{0}', space=vmem, size = 0x4000, scoped, tag = 'input window, operand 2, single buffered']
    #allocation8 [shape = 'u8[8192]{0}', space=vmem, size = 0x2000, scoped, tag = 'input window, operand 3, single buffered']
    #allocation9 [shape = 's32[1]{0}', space=sflag, size = 0x4, scoped, tag = 'scoped memory for tpu_custom_call.1']
    #allocation10 [shape = 'u8[524288]{0}', space=vmem, size = 0x80000, scoped, tag = 'input window, operand 5, single buffered']
    #allocation11 [shape = 'u8[2048]{0}', space=vmem, size = 0x800, scoped, tag = 'input window, operand 6, single buffered']
    #allocation12 [shape = 's32[1]{0}', space=sflag, size = 0x4, scoped, tag = 'scoped memory for tpu_custom_call.1']
    #allocation13 [shape = 'u8[524288]{0}', space=vmem, size = 0x80000, scoped, tag = 'input window, operand 7, single buffered']
    #allocation14 [shape = 'u8[2048]{0}', space=vmem, size = 0x800, scoped, tag = 'input window, operand 9, single buffered']
    #allocation15 [shape = 's32[1]{0}', space=sflag, size = 0x4, scoped, tag = 'scoped memory for tpu_custom_call.1']
    %18 = vsyncpa [#allocation4], 0
    %19 = vsyncpa [#allocation6], 0
    %20 = vsyncpa [#allocation9], 0
    %21 = vsyncpa [#allocation12], 0
    %22 = vsyncpa [#allocation15], 0
    // Predicated region
    $region2: #{tpu_custom_call.1} parent=1 // pred_check
      _
    $region3: #{tpu_custom_call.1} parent=1 // pred_check_branch
      %24 = sbr.rel (0) target = $region5
    $region4: #{tpu_custom_call.1} parent=1 // pred_region
      %26 = vsyncadd [#allocation4], 0
      %s28 = sshll.u32 %s0, 4
      %s29 = int_to_ptr.hbm [resolvable:$true] %s28
      %s30 = sshll.u32 [#allocation3], 4
      %s31 = int_to_ptr.vmem [resolvable:$true] %s30
      %33 = dma.hbm_to_vmem [thread:$0]  %s29, 128, %s31, [#allocation4]
    $region5: #{tpu_custom_call.1} parent=1 // pred_fallthru
      _
    // Predicated region
    $region6: #{tpu_custom_call.1} parent=1 // pred_check
      _
    $region7: #{tpu_custom_call.1} parent=1 // pred_check_branch
      %35 = sbr.rel (0) target = $region9
    $region8: #{tpu_custom_call.1} parent=1 // pred_region
      %37 = vsyncadd [#allocation6], 0
      %s39 = sshll.u32 %s1, 4
      %s40 = int_to_ptr.hbm [resolvable:$true] %s39
      %s41 = sshll.u32 [#allocation5], 4
      %s42 = int_to_ptr.vmem [resolvable:$true] %s41
      %44 = dma.hbm_to_vmem [thread:$0]  %s40, 128, %s42, [#allocation6]
    $region9: #{tpu_custom_call.1} parent=1 // pred_fallthru
      _
    // Predicated region
    $region10: #{tpu_custom_call.1} parent=1 // pred_check
      _
    $region11: #{tpu_custom_call.1} parent=1 // pred_check_branch
      %46 = sbr.rel (0) target = $region13
    $region12: #{tpu_custom_call.1} parent=1 // pred_region
      %48 = vsyncadd [#allocation6], 0
      %s49 = sshll.u32 %s2, 4
      %s50 = int_to_ptr.hbm [resolvable:$true] %s49
      %s51 = sshll.u32 [#allocation7], 4
      %s52 = int_to_ptr.vmem [resolvable:$true] %s51
      %57 = dma.hbm_to_vmem [thread:$0]  %s50, 512, %s52, [#allocation6], 256, 256, 16
    $region13: #{tpu_custom_call.1} parent=1 // pred_fallthru
      _
    // Predicated region
    $region14: #{tpu_custom_call.1} parent=1 // pred_check
      _
    $region15: #{tpu_custom_call.1} parent=1 // pred_check_branch
      %59 = sbr.rel (0) target = $region17
    $region16: #{tpu_custom_call.1} parent=1 // pred_region
      %61 = vsyncadd [#allocation9], 0
      %s63 = sshll.u32 %s3, 4
      %s64 = int_to_ptr.hbm [resolvable:$true] %s63
      %s65 = sshll.u32 [#allocation8], 4
      %s66 = int_to_ptr.vmem [resolvable:$true] %s65
      %68 = dma.hbm_to_vmem [thread:$0]  %s64, 256, %s66, [#allocation9]
    $region17: #{tpu_custom_call.1} parent=1 // pred_fallthru
      _
    // Predicated region
    $region18: #{tpu_custom_call.1} parent=1 // pred_check
      _
    $region19: #{tpu_custom_call.1} parent=1 // pred_check_branch
      %70 = sbr.rel (0) target = $region21
    $region20: #{tpu_custom_call.1} parent=1 // pred_region
      _
    $region21: #{tpu_custom_call.1} parent=1 // pred_fallthru
      _
    // Predicated region
    $region22: #{tpu_custom_call.1} parent=1 // pred_check
      _
    $region23: #{tpu_custom_call.1} parent=1 // pred_check_branch
      %72 = sbr.rel (0) target = $region25
    $region24: #{tpu_custom_call.1} parent=1 // pred_region
      %74 = vsyncadd [#allocation9], 0
      %s75 = sshll.u32 %s5, 4
      %s76 = int_to_ptr.hbm [resolvable:$true] %s75
      %s77 = sshll.u32 [#allocation10], 4
      %s78 = int_to_ptr.vmem [resolvable:$true] %s77
      %83 = dma.hbm_to_vmem [thread:$0]  %s76, 16384, %s78, [#allocation9], 256, 256, 16
    $region25: #{tpu_custom_call.1} parent=1 // pred_fallthru
      _
    // Predicated region
    $region26: #{tpu_custom_call.1} parent=1 // pred_check
      _
    $region27: #{tpu_custom_call.1} parent=1 // pred_check_branch
      %85 = sbr.rel (0) target = $region29
    $region28: #{tpu_custom_call.1} parent=1 // pred_region
      %87 = vsyncadd [#allocation12], 0
      %s89 = sshll.u32 %s6, 4
      %s90 = int_to_ptr.hbm [resolvable:$true] %s89
      %s91 = sshll.u32 [#allocation11], 4
      %s92 = int_to_ptr.vmem [resolvable:$true] %s91
      %94 = dma.hbm_to_vmem [thread:$0]  %s90, 64, %s92, [#allocation12]
    $region29: #{tpu_custom_call.1} parent=1 // pred_fallthru
      _
    // Predicated region
    $region30: #{tpu_custom_call.1} parent=1 // pred_check
      _
    $region31: #{tpu_custom_call.1} parent=1 // pred_check_branch
      %96 = sbr.rel (0) target = $region33
    $region32: #{tpu_custom_call.1} parent=1 // pred_region
      %98 = vsyncadd [#allocation12], 0
      %s99 = sshll.u32 %s7, 4
      %s100 = int_to_ptr.hbm [resolvable:$true] %s99
      %s101 = sshll.u32 [#allocation13], 4
      %s102 = int_to_ptr.vmem [resolvable:$true] %s101
      %107 = dma.hbm_to_vmem [thread:$0]  %s100, 16384, %s102, [#allocation12], 256, 256, 16
    $region33: #{tpu_custom_call.1} parent=1 // pred_fallthru
      _
    // Predicated region
    $region34: #{tpu_custom_call.1} parent=1 // pred_check
      _
    $region35: #{tpu_custom_call.1} parent=1 // pred_check_branch
      %109 = sbr.rel (0) target = $region37
    $region36: #{tpu_custom_call.1} parent=1 // pred_region
      _
    $region37: #{tpu_custom_call.1} parent=1 // pred_fallthru
      _
    // Predicated region
    $region38: #{tpu_custom_call.1} parent=1 // pred_check
      _
    $region39: #{tpu_custom_call.1} parent=1 // pred_check_branch
      %111 = sbr.rel (0) target = $region41
    $region40: #{tpu_custom_call.1} parent=1 // pred_region
      %113 = vsyncadd [#allocation15], 0
      %s115 = sshll.u32 %s9, 4
      %s116 = int_to_ptr.hbm [resolvable:$true] %s115
      %s117 = sshll.u32 [#allocation14], 4
      %s118 = int_to_ptr.vmem [resolvable:$true] %s117
      %120 = dma.hbm_to_vmem [thread:$0]  %s116, 64, %s118, [#allocation15]
    $region41: #{tpu_custom_call.1} parent=1 // pred_fallthru
      _
    // Predicated region
    $region42: #{tpu_custom_call.1} parent=1 // pred_check
      _
    $region43: #{tpu_custom_call.1} parent=1 // pred_check_branch
      %122 = sbr.rel (0) target = $region45
    $region44: #{tpu_custom_call.1} parent=1 // pred_region
      _
    $region45: #{tpu_custom_call.1} parent=1 // pred_fallthru
      _
    // Predicated region
    $region46: #{tpu_custom_call.1} parent=1 // pred_check
      _
    $region47: #{tpu_custom_call.1} parent=1 // pred_check_branch
      %124 = sbr.rel (0) target = $region49
    $region48: #{tpu_custom_call.1} parent=1 // pred_region
      %126 = dma.done [#allocation4], 128
    $region49: #{tpu_custom_call.1} parent=1 // pred_fallthru
      _
    // Predicated region
    $region50: #{tpu_custom_call.1} parent=1 // pred_check
      _
    $region51: #{tpu_custom_call.1} parent=1 // pred_check_branch
      %128 = sbr.rel (0) target = $region53
    $region52: #{tpu_custom_call.1} parent=1 // pred_region
      %130 = dma.done [#allocation6], 128
    $region53: #{tpu_custom_call.1} parent=1 // pred_fallthru
      _
    // Predicated region
    $region54: #{tpu_custom_call.1} parent=1 // pred_check
      _
    $region55: #{tpu_custom_call.1} parent=1 // pred_check_branch
      %132 = sbr.rel (0) target = $region57
    $region56: #{tpu_custom_call.1} parent=1 // pred_region
      %134 = dma.done [#allocation6], 512
    $region57: #{tpu_custom_call.1} parent=1 // pred_fallthru
      _
    // Predicated region
    $region58: #{tpu_custom_call.1} parent=1 // pred_check
      _
    $region59: #{tpu_custom_call.1} parent=1 // pred_check_branch
      %136 = sbr.rel (0) target = $region61
    $region60: #{tpu_custom_call.1} parent=1 // pred_region
      %138 = dma.done [#allocation9], 256
    $region61: #{tpu_custom_call.1} parent=1 // pred_fallthru
      _
    // Predicated region
    $region62: #{tpu_custom_call.1} parent=1 // pred_check
      _
    $region63: #{tpu_custom_call.1} parent=1 // pred_check_branch
      %140 = sbr.rel (0) target = $region65
    $region64: #{tpu_custom_call.1} parent=1 // pred_region
      %142 = dma.done [#allocation9], 16384
    $region65: #{tpu_custom_call.1} parent=1 // pred_fallthru
      _
    // Predicated region
    $region66: #{tpu_custom_call.1} parent=1 // pred_check
      _
    $region67: #{tpu_custom_call.1} parent=1 // pred_check_branch
      %144 = sbr.rel (0) target = $region69
    $region68: #{tpu_custom_call.1} parent=1 // pred_region
      %146 = dma.done [#allocation12], 64
    $region69: #{tpu_custom_call.1} parent=1 // pred_fallthru
      _
    // Predicated region
    $region70: #{tpu_custom_call.1} parent=1 // pred_check
      _
    $region71: #{tpu_custom_call.1} parent=1 // pred_check_branch
      %148 = sbr.rel (0) target = $region73
    $region72: #{tpu_custom_call.1} parent=1 // pred_region
      %150 = dma.done [#allocation12], 16384
    $region73: #{tpu_custom_call.1} parent=1 // pred_fallthru
      _
    // Predicated region
    $region74: #{tpu_custom_call.1} parent=1 // pred_check
      _
    $region75: #{tpu_custom_call.1} parent=1 // pred_check_branch
      %152 = sbr.rel (0) target = $region77
    $region76: #{tpu_custom_call.1} parent=1 // pred_region
      %154 = dma.done [#allocation15], 64
    $region77: #{tpu_custom_call.1} parent=1 // pred_fallthru
      _
    %v156 = vld [vmem:[#allocation3] sm:$0xff]
    %v157 = vpack.c.bf16 %v156, %v156
    %v158 = vld [vmem:[#allocation5] sm:$0xff]
    %v159 = vpack.c.bf16 %v158, %v158
    %v160 = vld [vmem:[#allocation7] sm:$0xff]
    %v161 = vld [vmem:[#allocation7 + $0x8] sm:$0xff]
    %v162 = vld [vmem:[#allocation7 + $0x10] sm:$0xff]
    %v163 = vld [vmem:[#allocation7 + $0x18] sm:$0xff]
    %v164 = vld [vmem:[#allocation8] sm:$0xff]
    %v165 = vld [vmem:[#allocation8 + $0x8] sm:$0xff]
    %v168 = vunpack.c.l.b16 %v164
    %v169 = vunpack.c.h.b16 %v164
    %v170 = vunpack.c.l.b16 %v165
    %v171 = vunpack.c.h.b16 %v165
    %v172 = vpack.c.b16 %v168, %v168
    %v173 = vpack.c.b16 %v169, %v169
    %v174 = vpack.c.b16 %v170, %v170
    %v175 = vpack.c.b16 %v171, %v171
    %vm176 = vcmask 64512
    %v178 = vsel %vm176, %v159, 0
    %vm180 = vcmask 1043456
    %v182 = vsel %vm180, %v172, 0
    %v185 = vsel %vm180, %v173, 0
    %v188 = vsel %vm180, %v174, 0
    %v191 = vsel %vm180, %v175, 0
    %193 = vmatpush.bf16.msra.mxu0 0
    %194 = vmatpush.bf16.msra.mxu0 0
    %195 = vmatpush.bf16.msra.mxu0 0
    %196 = vmatpush.bf16.msra.mxu0 0
    %197 = vmatpush.bf16.msra.mxu0 0
    %198 = vmatpush.bf16.msra.mxu0 0
    %199 = vmatpush.bf16.msra.mxu0 0
    %200 = vmatpush.bf16.msra.mxu0 %v182
    %201 = vmatmul.bf16.gmra.mxu0 %v178
    %v202 = vpop.f32.mrf.mxu0
    %v203 = vadd.f32 0.0, %v202
    %v204 = vpop.f32.mrf.mxu0
    %205 = vdwg.mxu0
    %206 = vmatpush.bf16.msra.mxu0 0
    %207 = vmatpush.bf16.msra.mxu0 0
    %208 = vmatpush.bf16.msra.mxu0 0
    %209 = vmatpush.bf16.msra.mxu0 0
    %210 = vmatpush.bf16.msra.mxu0 0
    %211 = vmatpush.bf16.msra.mxu0 0
    %212 = vmatpush.bf16.msra.mxu0 0
    %213 = vmatpush.bf16.msra.mxu0 %v185
    %214 = vmatmul.bf16.gmra.mxu0 %v178
    %v215 = vpop.f32.mrf.mxu0
    %v216 = vadd.f32 0.0, %v215
    %v217 = vpop.f32.mrf.mxu0
    %218 = vdwg.mxu0
    %219 = vmatpush.bf16.msra.mxu0 0
    %220 = vmatpush.bf16.msra.mxu0 0
    %221 = vmatpush.bf16.msra.mxu0 0
    %222 = vmatpush.bf16.msra.mxu0 0
    %223 = vmatpush.bf16.msra.mxu0 0
    %224 = vmatpush.bf16.msra.mxu0 0
    %225 = vmatpush.bf16.msra.mxu0 0
    %226 = vmatpush.bf16.msra.mxu0 %v188
    %227 = vmatmul.bf16.gmra.mxu0 %v178
    %v228 = vpop.f32.mrf.mxu0
    %v229 = vadd.f32 0.0, %v228
    %v230 = vpop.f32.mrf.mxu0
    %231 = vdwg.mxu0
    %232 = vmatpush.bf16.msra.mxu0 0
    %233 = vmatpush.bf16.msra.mxu0 0
    %234 = vmatpush.bf16.msra.mxu0 0
    %235 = vmatpush.bf16.msra.mxu0 0
    %236 = vmatpush.bf16.msra.mxu0 0
    %237 = vmatpush.bf16.msra.mxu0 0
    %238 = vmatpush.bf16.msra.mxu0 0
    %239 = vmatpush.bf16.msra.mxu0 %v191
    %240 = vmatmul.bf16.gmra.mxu0 %v178
    %v241 = vpop.f32.mrf.mxu0
    %v242 = vadd.f32 0.0, %v241
    %v243 = vpop.f32.mrf.mxu0
    %244 = vdwg.mxu0
    %v249 = vunpack.c.l.b16 %v160
    %v250 = vunpack.c.h.b16 %v160
    %v251 = vunpack.c.l.b16 %v161
    %v252 = vunpack.c.h.b16 %v161
    %v253 = vunpack.c.l.b16 %v162
    %v254 = vunpack.c.h.b16 %v162
    %v255 = vunpack.c.l.b16 %v163
    %v256 = vunpack.c.h.b16 %v163
    %v257 = vpack.c.b16 %v253, %v249
    %v258 = vpack.c.b16 %v254, %v250
    %v259 = vpack.c.b16 %v255, %v251
    %v260 = vpack.c.b16 %v256, %v252
    %vm265 = vcmask 130048
    %v267 = vsel %vm265, %v157, 0
    %269 = vmatpush.bf16.msra.mxu0 0
    %270 = vmatpush.bf16.msra.mxu0 0
    %271 = vmatpush.bf16.msra.mxu0 0
    %272 = vmatpush.bf16.msra.mxu0 0
    %273 = vmatpush.bf16.msra.mxu0 0
    %274 = vmatpush.bf16.msra.mxu0 0
    %275 = vmatpush.bf16.msra.mxu0 0
    %276 = vmatpush.bf16.msra.mxu0 %v257
    %277 = vmatmul.bf16.gmra.mxu0 %v267
    %v278 = vpop.f32.mrf.mxu0
    %v279 = vadd.f32 %v203, %v278
    %v280 = vpop.f32.mrf.mxu0
    %281 = vdwg.mxu0
    %282 = vmatpush.bf16.msra.mxu0 0
    %283 = vmatpush.bf16.msra.mxu0 0
    %284 = vmatpush.bf16.msra.mxu0 0
    %285 = vmatpush.bf16.msra.mxu0 0
    %286 = vmatpush.bf16.msra.mxu0 0
    %287 = vmatpush.bf16.msra.mxu0 0
    %288 = vmatpush.bf16.msra.mxu0 0
    %289 = vmatpush.bf16.msra.mxu0 %v258
    %290 = vmatmul.bf16.gmra.mxu0 %v267
    %v291 = vpop.f32.mrf.mxu0
    %v292 = vadd.f32 %v216, %v291
    %v293 = vpop.f32.mrf.mxu0
    %294 = vdwg.mxu0
    %295 = vmatpush.bf16.msra.mxu0 0
    %296 = vmatpush.bf16.msra.mxu0 0
    %297 = vmatpush.bf16.msra.mxu0 0
    %298 = vmatpush.bf16.msra.mxu0 0
    %299 = vmatpush.bf16.msra.mxu0 0
    %300 = vmatpush.bf16.msra.mxu0 0
    %301 = vmatpush.bf16.msra.mxu0 0
    %302 = vmatpush.bf16.msra.mxu0 %v259
    %303 = vmatmul.bf16.gmra.mxu0 %v267
    %v304 = vpop.f32.mrf.mxu0
    %v305 = vadd.f32 %v229, %v304
    %v306 = vpop.f32.mrf.mxu0
    %307 = vdwg.mxu0
    %308 = vmatpush.bf16.msra.mxu0 0
    %309 = vmatpush.bf16.msra.mxu0 0
    %310 = vmatpush.bf16.msra.mxu0 0
    %311 = vmatpush.bf16.msra.mxu0 0
    %312 = vmatpush.bf16.msra.mxu0 0
    %313 = vmatpush.bf16.msra.mxu0 0
    %314 = vmatpush.bf16.msra.mxu0 0
    %315 = vmatpush.bf16.msra.mxu0 %v260
    %316 = vmatmul.bf16.gmra.mxu0 %v267
    %v317 = vpop.f32.mrf.mxu0
    %v318 = vadd.f32 %v242, %v317
    %v319 = vpop.f32.mrf.mxu0
    %320 = vdwg.mxu0
    %v321 = vld [vmem:[%s4] sm:$0xf]
    %v323 = vperm.slane %v321, 0
    %v324 = vperm.slane %v321, 1
    %v325 = vperm.slane %v321, 2
    %v326 = vperm.slane %v321, 3
    %v331 = vadd.f32 %v279, %v323
    %v332 = vadd.f32 %v292, %v324
    %v333 = vadd.f32 %v305, %v325
    %v334 = vadd.f32 %v318, %v326
    %v335 = vmax.f32 %v331, 0.0
    %v336 = vmax.f32 %v332, 0.0
    %v337 = vmax.f32 %v333, 0.0
    %v338 = vmax.f32 %v334, 0.0
    %v339 = vpack.c.bf16 %v335, %v335
    %v340 = vpack.c.bf16 %v336, %v336
    %v341 = vpack.c.bf16 %v337, %v337
    %v342 = vpack.c.bf16 %v338, %v338
    %v343 = vld [vmem:[#allocation10] sm:$0xff]
    %v344 = vld [vmem:[#allocation10 + $0x8] sm:$0xff]
    %v345 = vld [vmem:[#allocation10 + $0x10] sm:$0xff]
    %v346 = vld [vmem:[#allocation10 + $0x18] sm:$0xff]
    %v347 = vld [vmem:[#allocation10 + $0x20] sm:$0xff]
    %v348 = vld [vmem:[#allocation10 + $0x28] sm:$0xff]
    %v349 = vld [vmem:[#allocation10 + $0x30] sm:$0xff]
    %v350 = vld [vmem:[#allocation10 + $0x38] sm:$0xff]
    %v351 = vld [vmem:[#allocation10 + $0x40] sm:$0xff]
    %v352 = vld [vmem:[#allocation10 + $0x48] sm:$0xff]
    %v353 = vld [vmem:[#allocation10 + $0x50] sm:$0xff]
    %v354 = vld [vmem:[#allocation10 + $0x58] sm:$0xff]
    %v355 = vld [vmem:[#allocation10 + $0x60] sm:$0xff]
    %v356 = vld [vmem:[#allocation10 + $0x68] sm:$0xff]
    %v357 = vld [vmem:[#allocation10 + $0x70] sm:$0xff]
    %v358 = vld [vmem:[#allocation10 + $0x78] sm:$0xff]
    %v359 = vld [vmem:[#allocation10 + $0x80] sm:$0xff]
    %v360 = vld [vmem:[#allocation10 + $0x88] sm:$0xff]
    %v361 = vld [vmem:[#allocation10 + $0x90] sm:$0xff]
    %v362 = vld [vmem:[#allocation10 + $0x98] sm:$0xff]
    %v363 = vld [vmem:[#allocation10 + $0xa0] sm:$0xff]
    %v364 = vld [vmem:[#allocation10 + $0xa8] sm:$0xff]
    %v365 = vld [vmem:[#allocation10 + $0xb0] sm:$0xff]
    %v366 = vld [vmem:[#allocation10 + $0xb8] sm:$0xff]
    %v367 = vld [vmem:[#allocation10 + $0xc0] sm:$0xff]
    %v368 = vld [vmem:[#allocation10 + $0xc8] sm:$0xff]
    %v369 = vld [vmem:[#allocation10 + $0xd0] sm:$0xff]
    %v370 = vld [vmem:[#allocation10 + $0xd8] sm:$0xff]
    %v371 = vld [vmem:[#allocation10 + $0xe0] sm:$0xff]
    %v372 = vld [vmem:[#allocation10 + $0xe8] sm:$0xff]
    %v373 = vld [vmem:[#allocation10 + $0xf0] sm:$0xff]
    %v374 = vld [vmem:[#allocation10 + $0xf8] sm:$0xff]
    %v375 = vld [vmem:[#allocation10 + $0x100] sm:$0xff]
    %v376 = vld [vmem:[#allocation10 + $0x108] sm:$0xff]
    %v377 = vld [vmem:[#allocation10 + $0x110] sm:$0xff]
    %v378 = vld [vmem:[#allocation10 + $0x118] sm:$0xff]
    %v379 = vld [vmem:[#allocation10 + $0x120] sm:$0xff]
    %v380 = vld [vmem:[#allocation10 + $0x128] sm:$0xff]
    %v381 = vld [vmem:[#allocation10 + $0x130] sm:$0xff]
    %v382 = vld [vmem:[#allocation10 + $0x138] sm:$0xff]
    %v383 = vld [vmem:[#allocation10 + $0x140] sm:$0xff]
    %v384 = vld [vmem:[#allocation10 + $0x148] sm:$0xff]
    %v385 = vld [vmem:[#allocation10 + $0x150] sm:$0xff]
    %v386 = vld [vmem:[#allocation10 + $0x158] sm:$0xff]
    %v387 = vld [vmem:[#allocation10 + $0x160] sm:$0xff]
    %v388 = vld [vmem:[#allocation10 + $0x168] sm:$0xff]
    %v389 = vld [vmem:[#allocation10 + $0x170] sm:$0xff]
    %v390 = vld [vmem:[#allocation10 + $0x178] sm:$0xff]
    %v391 = vld [vmem:[#allocation10 + $0x180] sm:$0xff]
    %v392 = vld [vmem:[#allocation10 + $0x188] sm:$0xff]
    %v393 = vld [vmem:[#allocation10 + $0x190] sm:$0xff]
    %v394 = vld [vmem:[#allocation10 + $0x198] sm:$0xff]
    %v395 = vld [vmem:[#allocation10 + $0x1a0] sm:$0xff]
    %v396 = vld [vmem:[#allocation10 + $0x1a8] sm:$0xff]
    %v397 = vld [vmem:[#allocation10 + $0x1b0] sm:$0xff]
    %v398 = vld [vmem:[#allocation10 + $0x1b8] sm:$0xff]
    %v399 = vld [vmem:[#allocation10 + $0x1c0] sm:$0xff]
    %v400 = vld [vmem:[#allocation10 + $0x1c8] sm:$0xff]
    %v401 = vld [vmem:[#allocation10 + $0x1d0] sm:$0xff]
    %v402 = vld [vmem:[#allocation10 + $0x1d8] sm:$0xff]
    %v403 = vld [vmem:[#allocation10 + $0x1e0] sm:$0xff]
    %v404 = vld [vmem:[#allocation10 + $0x1e8] sm:$0xff]
    %v405 = vld [vmem:[#allocation10 + $0x1f0] sm:$0xff]
    %v406 = vld [vmem:[#allocation10 + $0x1f8] sm:$0xff]
    %v407 = vld [vmem:[#allocation10 + $0x200] sm:$0xff]
    %v408 = vld [vmem:[#allocation10 + $0x208] sm:$0xff]
    %v409 = vld [vmem:[#allocation10 + $0x210] sm:$0xff]
    %v410 = vld [vmem:[#allocation10 + $0x218] sm:$0xff]
    %v411 = vld [vmem:[#allocation10 + $0x220] sm:$0xff]
    %v412 = vld [vmem:[#allocation10 + $0x228] sm:$0xff]
    %v413 = vld [vmem:[#allocation10 + $0x230] sm:$0xff]
    %v414 = vld [vmem:[#allocation10 + $0x238] sm:$0xff]
    %v415 = vld [vmem:[#allocation10 + $0x240] sm:$0xff]
    %v416 = vld [vmem:[#allocation10 + $0x248] sm:$0xff]
    %v417 = vld [vmem:[#allocation10 + $0x250] sm:$0xff]
    %v418 = vld [vmem:[#allocation10 + $0x258] sm:$0xff]
    %v419 = vld [vmem:[#allocation10 + $0x260] sm:$0xff]
    %v420 = vld [vmem:[#allocation10 + $0x268] sm:$0xff]
    %v421 = vld [vmem:[#allocation10 + $0x270] sm:$0xff]
    %v422 = vld [vmem:[#allocation10 + $0x278] sm:$0xff]
    %v423 = vld [vmem:[#allocation10 + $0x280] sm:$0xff]
    %v424 = vld [vmem:[#allocation10 + $0x288] sm:$0xff]
    %v425 = vld [vmem:[#allocation10 + $0x290] sm:$0xff]
    %v426 = vld [vmem:[#allocation10 + $0x298] sm:$0xff]
    %v427 = vld [vmem:[#allocation10 + $0x2a0] sm:$0xff]
    %v428 = vld [vmem:[#allocation10 + $0x2a8] sm:$0xff]
    %v429 = vld [vmem:[#allocation10 + $0x2b0] sm:$0xff]
    %v430 = vld [vmem:[#allocation10 + $0x2b8] sm:$0xff]
    %v431 = vld [vmem:[#allocation10 + $0x2c0] sm:$0xff]
    %v432 = vld [vmem:[#allocation10 + $0x2c8] sm:$0xff]
    %v433 = vld [vmem:[#allocation10 + $0x2d0] sm:$0xff]
    %v434 = vld [vmem:[#allocation10 + $0x2d8] sm:$0xff]
    %v435 = vld [vmem:[#allocation10 + $0x2e0] sm:$0xff]
    %v436 = vld [vmem:[#allocation10 + $0x2e8] sm:$0xff]
    %v437 = vld [vmem:[#allocation10 + $0x2f0] sm:$0xff]
    %v438 = vld [vmem:[#allocation10 + $0x2f8] sm:$0xff]
    %v439 = vld [vmem:[#allocation10 + $0x300] sm:$0xff]
    %v440 = vld [vmem:[#allocation10 + $0x308] sm:$0xff]
    %v441 = vld [vmem:[#allocation10 + $0x310] sm:$0xff]
    %v442 = vld [vmem:[#allocation10 + $0x318] sm:$0xff]
    %v443 = vld [vmem:[#allocation10 + $0x320] sm:$0xff]
    %v444 = vld [vmem:[#allocation10 + $0x328] sm:$0xff]
    %v445 = vld [vmem:[#allocation10 + $0x330] sm:$0xff]
    %v446 = vld [vmem:[#allocation10 + $0x338] sm:$0xff]
    %v447 = vld [vmem:[#allocation10 + $0x340] sm:$0xff]
    %v448 = vld [vmem:[#allocation10 + $0x348] sm:$0xff]
    %v449 = vld [vmem:[#allocation10 + $0x350] sm:$0xff]
    %v450 = vld [vmem:[#allocation10 + $0x358] sm:$0xff]
    %v451 = vld [vmem:[#allocation10 + $0x360] sm:$0xff]
    %v452 = vld [vmem:[#allocation10 + $0x368] sm:$0xff]
    %v453 = vld [vmem:[#allocation10 + $0x370] sm:$0xff]
    %v454 = vld [vmem:[#allocation10 + $0x378] sm:$0xff]
    %v455 = vld [vmem:[#allocation10 + $0x380] sm:$0xff]
    %v456 = vld [vmem:[#allocation10 + $0x388] sm:$0xff]
    %v457 = vld [vmem:[#allocation10 + $0x390] sm:$0xff]
    %v458 = vld [vmem:[#allocation10 + $0x398] sm:$0xff]
    %v459 = vld [vmem:[#allocation10 + $0x3a0] sm:$0xff]
    %v460 = vld [vmem:[#allocation10 + $0x3a8] sm:$0xff]
    %v461 = vld [vmem:[#allocation10 + $0x3b0] sm:$0xff]
    %v462 = vld [vmem:[#allocation10 + $0x3b8] sm:$0xff]
    %v463 = vld [vmem:[#allocation10 + $0x3c0] sm:$0xff]
    %v464 = vld [vmem:[#allocation10 + $0x3c8] sm:$0xff]
    %v465 = vld [vmem:[#allocation10 + $0x3d0] sm:$0xff]
    %v466 = vld [vmem:[#allocation10 + $0x3d8] sm:$0xff]
    %v467 = vld [vmem:[#allocation10 + $0x3e0] sm:$0xff]
    %v468 = vld [vmem:[#allocation10 + $0x3e8] sm:$0xff]
    %v469 = vld [vmem:[#allocation10 + $0x3f0] sm:$0xff]
    %v470 = vld [vmem:[#allocation10 + $0x3f8] sm:$0xff]
    %v471 = vld [vmem:[#allocation11] sm:$0xf]
    %v473 = vperm.slane %v471, 0
    %v474 = vperm.slane %v471, 1
    %v475 = vperm.slane %v471, 2
    %v476 = vperm.slane %v471, 3
    %v609 = vunpack.c.l.b16 %v343
    %v610 = vunpack.c.h.b16 %v343
    %v611 = vunpack.c.l.b16 %v344
    %v612 = vunpack.c.h.b16 %v344
    %v613 = vunpack.c.l.b16 %v345
    %v614 = vunpack.c.h.b16 %v345
    %v615 = vunpack.c.l.b16 %v346
    %v616 = vunpack.c.h.b16 %v346
    %v617 = vunpack.c.l.b16 %v347
    %v618 = vunpack.c.h.b16 %v347
    %v619 = vunpack.c.l.b16 %v348
    %v620 = vunpack.c.h.b16 %v348
    %v621 = vunpack.c.l.b16 %v349
    %v622 = vunpack.c.h.b16 %v349
    %v623 = vunpack.c.l.b16 %v350
    %v624 = vunpack.c.h.b16 %v350
    %v625 = vunpack.c.l.b16 %v351
    %v626 = vunpack.c.h.b16 %v351
    %v627 = vunpack.c.l.b16 %v352
    %v628 = vunpack.c.h.b16 %v352
    %v629 = vunpack.c.l.b16 %v353
    %v630 = vunpack.c.h.b16 %v353
    %v631 = vunpack.c.l.b16 %v354
    %v632 = vunpack.c.h.b16 %v354
    %v633 = vunpack.c.l.b16 %v355
    %v634 = vunpack.c.h.b16 %v355
    %v635 = vunpack.c.l.b16 %v356
    %v636 = vunpack.c.h.b16 %v356
    %v637 = vunpack.c.l.b16 %v357
    %v638 = vunpack.c.h.b16 %v357
    %v639 = vunpack.c.l.b16 %v358
    %v640 = vunpack.c.h.b16 %v358
    %v641 = vunpack.c.l.b16 %v359
    %v642 = vunpack.c.h.b16 %v359
    %v643 = vunpack.c.l.b16 %v360
    %v644 = vunpack.c.h.b16 %v360
    %v645 = vunpack.c.l.b16 %v361
    %v646 = vunpack.c.h.b16 %v361
    %v647 = vunpack.c.l.b16 %v362
    %v648 = vunpack.c.h.b16 %v362
    %v649 = vunpack.c.l.b16 %v363
    %v650 = vunpack.c.h.b16 %v363
    %v651 = vunpack.c.l.b16 %v364
    %v652 = vunpack.c.h.b16 %v364
    %v653 = vunpack.c.l.b16 %v365
    %v654 = vunpack.c.h.b16 %v365
    %v655 = vunpack.c.l.b16 %v366
    %v656 = vunpack.c.h.b16 %v366
    %v657 = vunpack.c.l.b16 %v367
    %v658 = vunpack.c.h.b16 %v367
    %v659 = vunpack.c.l.b16 %v368
    %v660 = vunpack.c.h.b16 %v368
    %v661 = vunpack.c.l.b16 %v369
    %v662 = vunpack.c.h.b16 %v369
    %v663 = vunpack.c.l.b16 %v370
    %v664 = vunpack.c.h.b16 %v370
    %v665 = vunpack.c.l.b16 %v371
    %v666 = vunpack.c.h.b16 %v371
    %v667 = vunpack.c.l.b16 %v372
    %v668 = vunpack.c.h.b16 %v372
    %v669 = vunpack.c.l.b16 %v373
    %v670 = vunpack.c.h.b16 %v373
    %v671 = vunpack.c.l.b16 %v374
    %v672 = vunpack.c.h.b16 %v374
    %v673 = vunpack.c.l.b16 %v375
    %v674 = vunpack.c.h.b16 %v375
    %v675 = vunpack.c.l.b16 %v376
    %v676 = vunpack.c.h.b16 %v376
    %v677 = vunpack.c.l.b16 %v377
    %v678 = vunpack.c.h.b16 %v377
    %v679 = vunpack.c.l.b16 %v378
    %v680 = vunpack.c.h.b16 %v378
    %v681 = vunpack.c.l.b16 %v379
    %v682 = vunpack.c.h.b16 %v379
    %v683 = vunpack.c.l.b16 %v380
    %v684 = vunpack.c.h.b16 %v380
    %v685 = vunpack.c.l.b16 %v381
    %v686 = vunpack.c.h.b16 %v381
    %v687 = vunpack.c.l.b16 %v382
    %v688 = vunpack.c.h.b16 %v382
    %v689 = vunpack.c.l.b16 %v383
    %v690 = vunpack.c.h.b16 %v383
    %v691 = vunpack.c.l.b16 %v384
    %v692 = vunpack.c.h.b16 %v384
    %v693 = vunpack.c.l.b16 %v385
    %v694 = vunpack.c.h.b16 %v385
    %v695 = vunpack.c.l.b16 %v386
    %v696 = vunpack.c.h.b16 %v386
    %v697 = vunpack.c.l.b16 %v387
    %v698 = vunpack.c.h.b16 %v387
    %v699 = vunpack.c.l.b16 %v388
    %v700 = vunpack.c.h.b16 %v388
    %v701 = vunpack.c.l.b16 %v389
    %v702 = vunpack.c.h.b16 %v389
    %v703 = vunpack.c.l.b16 %v390
    %v704 = vunpack.c.h.b16 %v390
    %v705 = vunpack.c.l.b16 %v391
    %v706 = vunpack.c.h.b16 %v391
    %v707 = vunpack.c.l.b16 %v392
    %v708 = vunpack.c.h.b16 %v392
    %v709 = vunpack.c.l.b16 %v393
    %v710 = vunpack.c.h.b16 %v393
    %v711 = vunpack.c.l.b16 %v394
    %v712 = vunpack.c.h.b16 %v394
    %v713 = vunpack.c.l.b16 %v395
    %v714 = vunpack.c.h.b16 %v395
    %v715 = vunpack.c.l.b16 %v396
    %v716 = vunpack.c.h.b16 %v396
    %v717 = vunpack.c.l.b16 %v397
    %v718 = vunpack.c.h.b16 %v397
    %v719 = vunpack.c.l.b16 %v398
    %v720 = vunpack.c.h.b16 %v398
    %v721 = vunpack.c.l.b16 %v399
    %v722 = vunpack.c.h.b16 %v399
    %v723 = vunpack.c.l.b16 %v400
    %v724 = vunpack.c.h.b16 %v400
    %v725 = vunpack.c.l.b16 %v401
    %v726 = vunpack.c.h.b16 %v401
    %v727 = vunpack.c.l.b16 %v402
    %v728 = vunpack.c.h.b16 %v402
    %v729 = vunpack.c.l.b16 %v403
    %v730 = vunpack.c.h.b16 %v403
    %v731 = vunpack.c.l.b16 %v404
    %v732 = vunpack.c.h.b16 %v404
    %v733 = vunpack.c.l.b16 %v405
    %v734 = vunpack.c.h.b16 %v405
    %v735 = vunpack.c.l.b16 %v406
    %v736 = vunpack.c.h.b16 %v406
    %v737 = vunpack.c.l.b16 %v407
    %v738 = vunpack.c.h.b16 %v407
    %v739 = vunpack.c.l.b16 %v408
    %v740 = vunpack.c.h.b16 %v408
    %v741 = vunpack.c.l.b16 %v409
    %v742 = vunpack.c.h.b16 %v409
    %v743 = vunpack.c.l.b16 %v410
    %v744 = vunpack.c.h.b16 %v410
    %v745 = vunpack.c.l.b16 %v411
    %v746 = vunpack.c.h.b16 %v411
    %v747 = vunpack.c.l.b16 %v412
    %v748 = vunpack.c.h.b16 %v412
    %v749 = vunpack.c.l.b16 %v413
    %v750 = vunpack.c.h.b16 %v413
    %v751 = vunpack.c.l.b16 %v414
    %v752 = vunpack.c.h.b16 %v414
    %v753 = vunpack.c.l.b16 %v415
    %v754 = vunpack.c.h.b16 %v415
    %v755 = vunpack.c.l.b16 %v416
    %v756 = vunpack.c.h.b16 %v416
    %v757 = vunpack.c.l.b16 %v417
    %v758 = vunpack.c.h.b16 %v417
    %v759 = vunpack.c.l.b16 %v418
    %v760 = vunpack.c.h.b16 %v418
    %v761 = vunpack.c.l.b16 %v419
    %v762 = vunpack.c.h.b16 %v419
    %v763 = vunpack.c.l.b16 %v420
    %v764 = vunpack.c.h.b16 %v420
    %v765 = vunpack.c.l.b16 %v421
    %v766 = vunpack.c.h.b16 %v421
    %v767 = vunpack.c.l.b16 %v422
    %v768 = vunpack.c.h.b16 %v422
    %v769 = vunpack.c.l.b16 %v423
    %v770 = vunpack.c.h.b16 %v423
    %v771 = vunpack.c.l.b16 %v424
    %v772 = vunpack.c.h.b16 %v424
    %v773 = vunpack.c.l.b16 %v425
    %v774 = vunpack.c.h.b16 %v425
    %v775 = vunpack.c.l.b16 %v426
    %v776 = vunpack.c.h.b16 %v426
    %v777 = vunpack.c.l.b16 %v427
    %v778 = vunpack.c.h.b16 %v427
    %v779 = vunpack.c.l.b16 %v428
    %v780 = vunpack.c.h.b16 %v428
    %v781 = vunpack.c.l.b16 %v429
    %v782 = vunpack.c.h.b16 %v429
    %v783 = vunpack.c.l.b16 %v430
    %v784 = vunpack.c.h.b16 %v430
    %v785 = vunpack.c.l.b16 %v431
    %v786 = vunpack.c.h.b16 %v431
    %v787 = vunpack.c.l.b16 %v432
    %v788 = vunpack.c.h.b16 %v432
    %v789 = vunpack.c.l.b16 %v433
    %v790 = vunpack.c.h.b16 %v433
    %v791 = vunpack.c.l.b16 %v434
    %v792 = vunpack.c.h.b16 %v434
    %v793 = vunpack.c.l.b16 %v435
    %v794 = vunpack.c.h.b16 %v435
    %v795 = vunpack.c.l.b16 %v436
    %v796 = vunpack.c.h.b16 %v436
    %v797 = vunpack.c.l.b16 %v437
    %v798 = vunpack.c.h.b16 %v437
    %v799 = vunpack.c.l.b16 %v438
    %v800 = vunpack.c.h.b16 %v438
    %v801 = vunpack.c.l.b16 %v439
    %v802 = vunpack.c.h.b16 %v439
    %v803 = vunpack.c.l.b16 %v440
    %v804 = vunpack.c.h.b16 %v440
    %v805 = vunpack.c.l.b16 %v441
    %v806 = vunpack.c.h.b16 %v441
    %v807 = vunpack.c.l.b16 %v442
    %v808 = vunpack.c.h.b16 %v442
    %v809 = vunpack.c.l.b16 %v443
    %v810 = vunpack.c.h.b16 %v443
    %v811 = vunpack.c.l.b16 %v444
    %v812 = vunpack.c.h.b16 %v444
    %v813 = vunpack.c.l.b16 %v445
    %v814 = vunpack.c.h.b16 %v445
    %v815 = vunpack.c.l.b16 %v446
    %v816 = vunpack.c.h.b16 %v446
    %v817 = vunpack.c.l.b16 %v447
    %v818 = vunpack.c.h.b16 %v447
    %v819 = vunpack.c.l.b16 %v448
    %v820 = vunpack.c.h.b16 %v448
    %v821 = vunpack.c.l.b16 %v449
    %v822 = vunpack.c.h.b16 %v449
    %v823 = vunpack.c.l.b16 %v450
    %v824 = vunpack.c.h.b16 %v450
    %v825 = vunpack.c.l.b16 %v451
    %v826 = vunpack.c.h.b16 %v451
    %v827 = vunpack.c.l.b16 %v452
    %v828 = vunpack.c.h.b16 %v452
    %v829 = vunpack.c.l.b16 %v453
    %v830 = vunpack.c.h.b16 %v453
    %v831 = vunpack.c.l.b16 %v454
    %v832 = vunpack.c.h.b16 %v454
    %v833 = vunpack.c.l.b16 %v455
    %v834 = vunpack.c.h.b16 %v455
    %v835 = vunpack.c.l.b16 %v456
    %v836 = vunpack.c.h.b16 %v456
    %v837 = vunpack.c.l.b16 %v457
    %v838 = vunpack.c.h.b16 %v457
    %v839 = vunpack.c.l.b16 %v458
    %v840 = vunpack.c.h.b16 %v458
    %v841 = vunpack.c.l.b16 %v459
    %v842 = vunpack.c.h.b16 %v459
    %v843 = vunpack.c.l.b16 %v460
    %v844 = vunpack.c.h.b16 %v460
    %v845 = vunpack.c.l.b16 %v461
    %v846 = vunpack.c.h.b16 %v461
    %v847 = vunpack.c.l.b16 %v462
    %v848 = vunpack.c.h.b16 %v462
    %v849 = vunpack.c.l.b16 %v463
    %v850 = vunpack.c.h.b16 %v463
    %v851 = vunpack.c.l.b16 %v464
    %v852 = vunpack.c.h.b16 %v464
    %v853 = vunpack.c.l.b16 %v465
    %v854 = vunpack.c.h.b16 %v465
    %v855 = vunpack.c.l.b16 %v466
    %v856 = vunpack.c.h.b16 %v466
    %v857 = vunpack.c.l.b16 %v467
    %v858 = vunpack.c.h.b16 %v467
    %v859 = vunpack.c.l.b16 %v468
    %v860 = vunpack.c.h.b16 %v468
    %v861 = vunpack.c.l.b16 %v469
    %v862 = vunpack.c.h.b16 %v469
    %v863 = vunpack.c.l.b16 %v470
    %v864 = vunpack.c.h.b16 %v470
    %v865 = vpack.c.b16 %v613, %v609
    %v866 = vpack.c.b16 %v614, %v610
    %v867 = vpack.c.b16 %v615, %v611
    %v868 = vpack.c.b16 %v616, %v612
    %v869 = vpack.c.b16 %v621, %v617
    %v870 = vpack.c.b16 %v622, %v618
    %v871 = vpack.c.b16 %v623, %v619
    %v872 = vpack.c.b16 %v624, %v620
    %v873 = vpack.c.b16 %v629, %v625
    %v874 = vpack.c.b16 %v630, %v626
    %v875 = vpack.c.b16 %v631, %v627
    %v876 = vpack.c.b16 %v632, %v628
    %v877 = vpack.c.b16 %v637, %v633
    %v878 = vpack.c.b16 %v638, %v634
    %v879 = vpack.c.b16 %v639, %v635
    %v880 = vpack.c.b16 %v640, %v636
    %v881 = vpack.c.b16 %v645, %v641
    %v882 = vpack.c.b16 %v646, %v642
    %v883 = vpack.c.b16 %v647, %v643
    %v884 = vpack.c.b16 %v648, %v644
    %v885 = vpack.c.b16 %v653, %v649
    %v886 = vpack.c.b16 %v654, %v650
    %v887 = vpack.c.b16 %v655, %v651
    %v888 = vpack.c.b16 %v656, %v652
    %v889 = vpack.c.b16 %v661, %v657
    %v890 = vpack.c.b16 %v662, %v658
    %v891 = vpack.c.b16 %v663, %v659
    %v892 = vpack.c.b16 %v664, %v660
    %v893 = vpack.c.b16 %v669, %v665
    %v894 = vpack.c.b16 %v670, %v666
    %v895 = vpack.c.b16 %v671, %v667
    %v896 = vpack.c.b16 %v672, %v668
    %v897 = vpack.c.b16 %v677, %v673
    %v898 = vpack.c.b16 %v678, %v674
    %v899 = vpack.c.b16 %v679, %v675
    %v900 = vpack.c.b16 %v680, %v676
    %v901 = vpack.c.b16 %v685, %v681
    %v902 = vpack.c.b16 %v686, %v682
    %v903 = vpack.c.b16 %v687, %v683
    %v904 = vpack.c.b16 %v688, %v684
    %v905 = vpack.c.b16 %v693, %v689
    %v906 = vpack.c.b16 %v694, %v690
    %v907 = vpack.c.b16 %v695, %v691
    %v908 = vpack.c.b16 %v696, %v692
    %v909 = vpack.c.b16 %v701, %v697
    %v910 = vpack.c.b16 %v702, %v698
    %v911 = vpack.c.b16 %v703, %v699
    %v912 = vpack.c.b16 %v704, %v700
    %v913 = vpack.c.b16 %v709, %v705
    %v914 = vpack.c.b16 %v710, %v706
    %v915 = vpack.c.b16 %v711, %v707
    %v916 = vpack.c.b16 %v712, %v708
    %v917 = vpack.c.b16 %v717, %v713
    %v918 = vpack.c.b16 %v718, %v714
    %v919 = vpack.c.b16 %v719, %v715
    %v920 = vpack.c.b16 %v720, %v716
    %v921 = vpack.c.b16 %v725, %v721
    %v922 = vpack.c.b16 %v726, %v722
    %v923 = vpack.c.b16 %v727, %v723
    %v924 = vpack.c.b16 %v728, %v724
    %v925 = vpack.c.b16 %v733, %v729
    %v926 = vpack.c.b16 %v734, %v730
    %v927 = vpack.c.b16 %v735, %v731
    %v928 = vpack.c.b16 %v736, %v732
    %v929 = vpack.c.b16 %v741, %v737
    %v930 = vpack.c.b16 %v742, %v738
    %v931 = vpack.c.b16 %v743, %v739
    %v932 = vpack.c.b16 %v744, %v740
    %v933 = vpack.c.b16 %v749, %v745
    %v934 = vpack.c.b16 %v750, %v746
    %v935 = vpack.c.b16 %v751, %v747
    %v936 = vpack.c.b16 %v752, %v748
    %v937 = vpack.c.b16 %v757, %v753
    %v938 = vpack.c.b16 %v758, %v754
    %v939 = vpack.c.b16 %v759, %v755
    %v940 = vpack.c.b16 %v760, %v756
    %v941 = vpack.c.b16 %v765, %v761
    %v942 = vpack.c.b16 %v766, %v762
    %v943 = vpack.c.b16 %v767, %v763
    %v944 = vpack.c.b16 %v768, %v764
    %v945 = vpack.c.b16 %v773, %v769
    %v946 = vpack.c.b16 %v774, %v770
    %v947 = vpack.c.b16 %v775, %v771
    %v948 = vpack.c.b16 %v776, %v772
    %v949 = vpack.c.b16 %v781, %v777
    %v950 = vpack.c.b16 %v782, %v778
    %v951 = vpack.c.b16 %v783, %v779
    %v952 = vpack.c.b16 %v784, %v780
    %v953 = vpack.c.b16 %v789, %v785
    %v954 = vpack.c.b16 %v790, %v786
    %v955 = vpack.c.b16 %v791, %v787
    %v956 = vpack.c.b16 %v792, %v788
    %v957 = vpack.c.b16 %v797, %v793
    %v958 = vpack.c.b16 %v798, %v794
    %v959 = vpack.c.b16 %v799, %v795
    %v960 = vpack.c.b16 %v800, %v796
    %v961 = vpack.c.b16 %v805, %v801
    %v962 = vpack.c.b16 %v806, %v802
    %v963 = vpack.c.b16 %v807, %v803
    %v964 = vpack.c.b16 %v808, %v804
    %v965 = vpack.c.b16 %v813, %v809
    %v966 = vpack.c.b16 %v814, %v810
    %v967 = vpack.c.b16 %v815, %v811
    %v968 = vpack.c.b16 %v816, %v812
    %v969 = vpack.c.b16 %v821, %v817
    %v970 = vpack.c.b16 %v822, %v818
    %v971 = vpack.c.b16 %v823, %v819
    %v972 = vpack.c.b16 %v824, %v820
    %v973 = vpack.c.b16 %v829, %v825
    %v974 = vpack.c.b16 %v830, %v826
    %v975 = vpack.c.b16 %v831, %v827
    %v976 = vpack.c.b16 %v832, %v828
    %v977 = vpack.c.b16 %v837, %v833
    %v978 = vpack.c.b16 %v838, %v834
    %v979 = vpack.c.b16 %v839, %v835
    %v980 = vpack.c.b16 %v840, %v836
    %v981 = vpack.c.b16 %v845, %v841
    %v982 = vpack.c.b16 %v846, %v842
    %v983 = vpack.c.b16 %v847, %v843
    %v984 = vpack.c.b16 %v848, %v844
    %v985 = vpack.c.b16 %v853, %v849
    %v986 = vpack.c.b16 %v854, %v850
    %v987 = vpack.c.b16 %v855, %v851
    %v988 = vpack.c.b16 %v856, %v852
    %v989 = vpack.c.b16 %v861, %v857
    %v990 = vpack.c.b16 %v862, %v858
    %v991 = vpack.c.b16 %v863, %v859
    %v992 = vpack.c.b16 %v864, %v860
    %1121 = vmatpush.bf16.msra.mxu0 %v893
    %1122 = vmatpush.bf16.msra.mxu0 %v889
    %1123 = vmatpush.bf16.msra.mxu0 %v885
    %1124 = vmatpush.bf16.msra.mxu0 %v881
    %1125 = vmatpush.bf16.msra.mxu0 %v877
    %1126 = vmatpush.bf16.msra.mxu0 %v873
    %1127 = vmatpush.bf16.msra.mxu0 %v869
    %1128 = vmatpush.bf16.msra.mxu0 %v865
    %1129 = vmatmul.bf16.gmra.mxu0 %v339
    %v1130 = vpop.f32.mrf.mxu0
    %v1131 = vadd.f32 %v473, %v1130
    %v1132 = vpop.f32.mrf.mxu0
    %1133 = vdwg.mxu0
    %1134 = vmatpush.bf16.msra.mxu0 %v925
    %1135 = vmatpush.bf16.msra.mxu0 %v921
    %1136 = vmatpush.bf16.msra.mxu0 %v917
    %1137 = vmatpush.bf16.msra.mxu0 %v913
    %1138 = vmatpush.bf16.msra.mxu0 %v909
    %1139 = vmatpush.bf16.msra.mxu0 %v905
    %1140 = vmatpush.bf16.msra.mxu0 %v901
    %1141 = vmatpush.bf16.msra.mxu0 %v897
    %1142 = vmatmul.bf16.gmra.mxu0 %v340
    %v1143 = vpop.f32.mrf.mxu0
    %v1144 = vadd.f32 %v1131, %v1143
    %v1145 = vpop.f32.mrf.mxu0
    %1146 = vdwg.mxu0
    %1147 = vmatpush.bf16.msra.mxu0 %v957
    %1148 = vmatpush.bf16.msra.mxu0 %v953
    %1149 = vmatpush.bf16.msra.mxu0 %v949
    %1150 = vmatpush.bf16.msra.mxu0 %v945
    %1151 = vmatpush.bf16.msra.mxu0 %v941
    %1152 = vmatpush.bf16.msra.mxu0 %v937
    %1153 = vmatpush.bf16.msra.mxu0 %v933
    %1154 = vmatpush.bf16.msra.mxu0 %v929
    %1155 = vmatmul.bf16.gmra.mxu0 %v341
    %v1156 = vpop.f32.mrf.mxu0
    %v1157 = vadd.f32 %v1144, %v1156
    %v1158 = vpop.f32.mrf.mxu0
    %1159 = vdwg.mxu0
    %1160 = vmatpush.bf16.msra.mxu0 %v989
    %1161 = vmatpush.bf16.msra.mxu0 %v985
    %1162 = vmatpush.bf16.msra.mxu0 %v981
    %1163 = vmatpush.bf16.msra.mxu0 %v977
    %1164 = vmatpush.bf16.msra.mxu0 %v973
    %1165 = vmatpush.bf16.msra.mxu0 %v969
    %1166 = vmatpush.bf16.msra.mxu0 %v965
    %1167 = vmatpush.bf16.msra.mxu0 %v961
    %1168 = vmatmul.bf16.gmra.mxu0 %v342
    %v1169 = vpop.f32.mrf.mxu0
    %v1170 = vadd.f32 %v1157, %v1169
    %v1171 = vpop.f32.mrf.mxu0
    %1172 = vdwg.mxu0
    %1173 = vmatpush.bf16.msra.mxu0 %v894
    %1174 = vmatpush.bf16.msra.mxu0 %v890
    %1175 = vmatpush.bf16.msra.mxu0 %v886
    %1176 = vmatpush.bf16.msra.mxu0 %v882
    %1177 = vmatpush.bf16.msra.mxu0 %v878
    %1178 = vmatpush.bf16.msra.mxu0 %v874
    %1179 = vmatpush.bf16.msra.mxu0 %v870
    %1180 = vmatpush.bf16.msra.mxu0 %v866
    %1181 = vmatmul.bf16.gmra.mxu0 %v339
    %v1182 = vpop.f32.mrf.mxu0
    %v1183 = vadd.f32 %v474, %v1182
    %v1184 = vpop.f32.mrf.mxu0
    %1185 = vdwg.mxu0
    %1186 = vmatpush.bf16.msra.mxu0 %v926
    %1187 = vmatpush.bf16.msra.mxu0 %v922
    %1188 = vmatpush.bf16.msra.mxu0 %v918
    %1189 = vmatpush.bf16.msra.mxu0 %v914
    %1190 = vmatpush.bf16.msra.mxu0 %v910
    %1191 = vmatpush.bf16.msra.mxu0 %v906
    %1192 = vmatpush.bf16.msra.mxu0 %v902
    %1193 = vmatpush.bf16.msra.mxu0 %v898
    %1194 = vmatmul.bf16.gmra.mxu0 %v340
    %v1195 = vpop.f32.mrf.mxu0
    %v1196 = vadd.f32 %v1183, %v1195
    %v1197 = vpop.f32.mrf.mxu0
    %1198 = vdwg.mxu0
    %1199 = vmatpush.bf16.msra.mxu0 %v958
    %1200 = vmatpush.bf16.msra.mxu0 %v954
    %1201 = vmatpush.bf16.msra.mxu0 %v950
    %1202 = vmatpush.bf16.msra.mxu0 %v946
    %1203 = vmatpush.bf16.msra.mxu0 %v942
    %1204 = vmatpush.bf16.msra.mxu0 %v938
    %1205 = vmatpush.bf16.msra.mxu0 %v934
    %1206 = vmatpush.bf16.msra.mxu0 %v930
    %1207 = vmatmul.bf16.gmra.mxu0 %v341
    %v1208 = vpop.f32.mrf.mxu0
    %v1209 = vadd.f32 %v1196, %v1208
    %v1210 = vpop.f32.mrf.mxu0
    %1211 = vdwg.mxu0
    %1212 = vmatpush.bf16.msra.mxu0 %v990
    %1213 = vmatpush.bf16.msra.mxu0 %v986
    %1214 = vmatpush.bf16.msra.mxu0 %v982
    %1215 = vmatpush.bf16.msra.mxu0 %v978
    %1216 = vmatpush.bf16.msra.mxu0 %v974
    %1217 = vmatpush.bf16.msra.mxu0 %v970
    %1218 = vmatpush.bf16.msra.mxu0 %v966
    %1219 = vmatpush.bf16.msra.mxu0 %v962
    %1220 = vmatmul.bf16.gmra.mxu0 %v342
    %v1221 = vpop.f32.mrf.mxu0
    %v1222 = vadd.f32 %v1209, %v1221
    %v1223 = vpop.f32.mrf.mxu0
    %1224 = vdwg.mxu0
    %1225 = vmatpush.bf16.msra.mxu0 %v895
    %1226 = vmatpush.bf16.msra.mxu0 %v891
    %1227 = vmatpush.bf16.msra.mxu0 %v887
    %1228 = vmatpush.bf16.msra.mxu0 %v883
    %1229 = vmatpush.bf16.msra.mxu0 %v879
    %1230 = vmatpush.bf16.msra.mxu0 %v875
    %1231 = vmatpush.bf16.msra.mxu0 %v871
    %1232 = vmatpush.bf16.msra.mxu0 %v867
    %1233 = vmatmul.bf16.gmra.mxu0 %v339
    %v1234 = vpop.f32.mrf.mxu0
    %v1235 = vadd.f32 %v475, %v1234
    %v1236 = vpop.f32.mrf.mxu0
    %1237 = vdwg.mxu0
    %1238 = vmatpush.bf16.msra.mxu0 %v927
    %1239 = vmatpush.bf16.msra.mxu0 %v923
    %1240 = vmatpush.bf16.msra.mxu0 %v919
    %1241 = vmatpush.bf16.msra.mxu0 %v915
    %1242 = vmatpush.bf16.msra.mxu0 %v911
    %1243 = vmatpush.bf16.msra.mxu0 %v907
    %1244 = vmatpush.bf16.msra.mxu0 %v903
    %1245 = vmatpush.bf16.msra.mxu0 %v899
    %1246 = vmatmul.bf16.gmra.mxu0 %v340
    %v1247 = vpop.f32.mrf.mxu0
    %v1248 = vadd.f32 %v1235, %v1247
    %v1249 = vpop.f32.mrf.mxu0
    %1250 = vdwg.mxu0
    %1251 = vmatpush.bf16.msra.mxu0 %v959
    %1252 = vmatpush.bf16.msra.mxu0 %v955
    %1253 = vmatpush.bf16.msra.mxu0 %v951
    %1254 = vmatpush.bf16.msra.mxu0 %v947
    %1255 = vmatpush.bf16.msra.mxu0 %v943
    %1256 = vmatpush.bf16.msra.mxu0 %v939
    %1257 = vmatpush.bf16.msra.mxu0 %v935
    %1258 = vmatpush.bf16.msra.mxu0 %v931
    %1259 = vmatmul.bf16.gmra.mxu0 %v341
    %v1260 = vpop.f32.mrf.mxu0
    %v1261 = vadd.f32 %v1248, %v1260
    %v1262 = vpop.f32.mrf.mxu0
    %1263 = vdwg.mxu0
    %1264 = vmatpush.bf16.msra.mxu0 %v991
    %1265 = vmatpush.bf16.msra.mxu0 %v987
    %1266 = vmatpush.bf16.msra.mxu0 %v983
    %1267 = vmatpush.bf16.msra.mxu0 %v979
    %1268 = vmatpush.bf16.msra.mxu0 %v975
    %1269 = vmatpush.bf16.msra.mxu0 %v971
    %1270 = vmatpush.bf16.msra.mxu0 %v967
    %1271 = vmatpush.bf16.msra.mxu0 %v963
    %1272 = vmatmul.bf16.gmra.mxu0 %v342
    %v1273 = vpop.f32.mrf.mxu0
    %v1274 = vadd.f32 %v1261, %v1273
    %v1275 = vpop.f32.mrf.mxu0
    %1276 = vdwg.mxu0
    %1277 = vmatpush.bf16.msra.mxu0 %v896
    %1278 = vmatpush.bf16.msra.mxu0 %v892
    %1279 = vmatpush.bf16.msra.mxu0 %v888
    %1280 = vmatpush.bf16.msra.mxu0 %v884
    %1281 = vmatpush.bf16.msra.mxu0 %v880
    %1282 = vmatpush.bf16.msra.mxu0 %v876
    %1283 = vmatpush.bf16.msra.mxu0 %v872
    %1284 = vmatpush.bf16.msra.mxu0 %v868
    %1285 = vmatmul.bf16.gmra.mxu0 %v339
    %v1286 = vpop.f32.mrf.mxu0
    %v1287 = vadd.f32 %v476, %v1286
    %v1288 = vpop.f32.mrf.mxu0
    %1289 = vdwg.mxu0
    %1290 = vmatpush.bf16.msra.mxu0 %v928
    %1291 = vmatpush.bf16.msra.mxu0 %v924
    %1292 = vmatpush.bf16.msra.mxu0 %v920
    %1293 = vmatpush.bf16.msra.mxu0 %v916
    %1294 = vmatpush.bf16.msra.mxu0 %v912
    %1295 = vmatpush.bf16.msra.mxu0 %v908
    %1296 = vmatpush.bf16.msra.mxu0 %v904
    %1297 = vmatpush.bf16.msra.mxu0 %v900
    %1298 = vmatmul.bf16.gmra.mxu0 %v340
    %v1299 = vpop.f32.mrf.mxu0
    %v1300 = vadd.f32 %v1287, %v1299
    %v1301 = vpop.f32.mrf.mxu0
    %1302 = vdwg.mxu0
    %1303 = vmatpush.bf16.msra.mxu0 %v960
    %1304 = vmatpush.bf16.msra.mxu0 %v956
    %1305 = vmatpush.bf16.msra.mxu0 %v952
    %1306 = vmatpush.bf16.msra.mxu0 %v948
    %1307 = vmatpush.bf16.msra.mxu0 %v944
    %1308 = vmatpush.bf16.msra.mxu0 %v940
    %1309 = vmatpush.bf16.msra.mxu0 %v936
    %1310 = vmatpush.bf16.msra.mxu0 %v932
    %1311 = vmatmul.bf16.gmra.mxu0 %v341
    %v1312 = vpop.f32.mrf.mxu0
    %v1313 = vadd.f32 %v1300, %v1312
    %v1314 = vpop.f32.mrf.mxu0
    %1315 = vdwg.mxu0
    %1316 = vmatpush.bf16.msra.mxu0 %v992
    %1317 = vmatpush.bf16.msra.mxu0 %v988
    %1318 = vmatpush.bf16.msra.mxu0 %v984
    %1319 = vmatpush.bf16.msra.mxu0 %v980
    %1320 = vmatpush.bf16.msra.mxu0 %v976
    %1321 = vmatpush.bf16.msra.mxu0 %v972
    %1322 = vmatpush.bf16.msra.mxu0 %v968
    %1323 = vmatpush.bf16.msra.mxu0 %v964
    %1324 = vmatmul.bf16.gmra.mxu0 %v342
    %v1325 = vpop.f32.mrf.mxu0
    %v1326 = vadd.f32 %v1313, %v1325
    %v1327 = vpop.f32.mrf.mxu0
    %1328 = vdwg.mxu0
    %v1329 = vmax.f32 %v1170, 0.0
    %v1330 = vmax.f32 %v1222, 0.0
    %v1331 = vmax.f32 %v1274, 0.0
    %v1332 = vmax.f32 %v1326, 0.0
    %v1333 = vpack.c.bf16 %v1329, %v1329
    %v1334 = vpack.c.bf16 %v1330, %v1330
    %v1335 = vpack.c.bf16 %v1331, %v1331
    %v1336 = vpack.c.bf16 %v1332, %v1332
    %v1337 = vld [vmem:[#allocation13] sm:$0xff]
    %v1338 = vld [vmem:[#allocation13 + $0x8] sm:$0xff]
    %v1339 = vld [vmem:[#allocation13 + $0x10] sm:$0xff]
    %v1340 = vld [vmem:[#allocation13 + $0x18] sm:$0xff]
    %v1341 = vld [vmem:[#allocation13 + $0x20] sm:$0xff]
    %v1342 = vld [vmem:[#allocation13 + $0x28] sm:$0xff]
    %v1343 = vld [vmem:[#allocation13 + $0x30] sm:$0xff]
    %v1344 = vld [vmem:[#allocation13 + $0x38] sm:$0xff]
    %v1345 = vld [vmem:[#allocation13 + $0x40] sm:$0xff]
    %v1346 = vld [vmem:[#allocation13 + $0x48] sm:$0xff]
    %v1347 = vld [vmem:[#allocation13 + $0x50] sm:$0xff]
    %v1348 = vld [vmem:[#allocation13 + $0x58] sm:$0xff]
    %v1349 = vld [vmem:[#allocation13 + $0x60] sm:$0xff]
    %v1350 = vld [vmem:[#allocation13 + $0x68] sm:$0xff]
    %v1351 = vld [vmem:[#allocation13 + $0x70] sm:$0xff]
    %v1352 = vld [vmem:[#allocation13 + $0x78] sm:$0xff]
    %v1353 = vld [vmem:[#allocation13 + $0x80] sm:$0xff]
    %v1354 = vld [vmem:[#allocation13 + $0x88] sm:$0xff]
    %v1355 = vld [vmem:[#allocation13 + $0x90] sm:$0xff]
    %v1356 = vld [vmem:[#allocation13 + $0x98] sm:$0xff]
    %v1357 = vld [vmem:[#allocation13 + $0xa0] sm:$0xff]
    %v1358 = vld [vmem:[#allocation13 + $0xa8] sm:$0xff]
    %v1359 = vld [vmem:[#allocation13 + $0xb0] sm:$0xff]
    %v1360 = vld [vmem:[#allocation13 + $0xb8] sm:$0xff]
    %v1361 = vld [vmem:[#allocation13 + $0xc0] sm:$0xff]
    %v1362 = vld [vmem:[#allocation13 + $0xc8] sm:$0xff]
    %v1363 = vld [vmem:[#allocation13 + $0xd0] sm:$0xff]
    %v1364 = vld [vmem:[#allocation13 + $0xd8] sm:$0xff]
    %v1365 = vld [vmem:[#allocation13 + $0xe0] sm:$0xff]
    %v1366 = vld [vmem:[#allocation13 + $0xe8] sm:$0xff]
    %v1367 = vld [vmem:[#allocation13 + $0xf0] sm:$0xff]
    %v1368 = vld [vmem:[#allocation13 + $0xf8] sm:$0xff]
    %v1369 = vld [vmem:[#allocation13 + $0x100] sm:$0xff]
    %v1370 = vld [vmem:[#allocation13 + $0x108] sm:$0xff]
    %v1371 = vld [vmem:[#allocation13 + $0x110] sm:$0xff]
    %v1372 = vld [vmem:[#allocation13 + $0x118] sm:$0xff]
    %v1373 = vld [vmem:[#allocation13 + $0x120] sm:$0xff]
    %v1374 = vld [vmem:[#allocation13 + $0x128] sm:$0xff]
    %v1375 = vld [vmem:[#allocation13 + $0x130] sm:$0xff]
    %v1376 = vld [vmem:[#allocation13 + $0x138] sm:$0xff]
    %v1377 = vld [vmem:[#allocation13 + $0x140] sm:$0xff]
    %v1378 = vld [vmem:[#allocation13 + $0x148] sm:$0xff]
    %v1379 = vld [vmem:[#allocation13 + $0x150] sm:$0xff]
    %v1380 = vld [vmem:[#allocation13 + $0x158] sm:$0xff]
    %v1381 = vld [vmem:[#allocation13 + $0x160] sm:$0xff]
    %v1382 = vld [vmem:[#allocation13 + $0x168] sm:$0xff]
    %v1383 = vld [vmem:[#allocation13 + $0x170] sm:$0xff]
    %v1384 = vld [vmem:[#allocation13 + $0x178] sm:$0xff]
    %v1385 = vld [vmem:[#allocation13 + $0x180] sm:$0xff]
    %v1386 = vld [vmem:[#allocation13 + $0x188] sm:$0xff]
    %v1387 = vld [vmem:[#allocation13 + $0x190] sm:$0xff]
    %v1388 = vld [vmem:[#allocation13 + $0x198] sm:$0xff]
    %v1389 = vld [vmem:[#allocation13 + $0x1a0] sm:$0xff]
    %v1390 = vld [vmem:[#allocation13 + $0x1a8] sm:$0xff]
    %v1391 = vld [vmem:[#allocation13 + $0x1b0] sm:$0xff]
    %v1392 = vld [vmem:[#allocation13 + $0x1b8] sm:$0xff]
    %v1393 = vld [vmem:[#allocation13 + $0x1c0] sm:$0xff]
    %v1394 = vld [vmem:[#allocation13 + $0x1c8] sm:$0xff]
    %v1395 = vld [vmem:[#allocation13 + $0x1d0] sm:$0xff]
    %v1396 = vld [vmem:[#allocation13 + $0x1d8] sm:$0xff]
    %v1397 = vld [vmem:[#allocation13 + $0x1e0] sm:$0xff]
    %v1398 = vld [vmem:[#allocation13 + $0x1e8] sm:$0xff]
    %v1399 = vld [vmem:[#allocation13 + $0x1f0] sm:$0xff]
    %v1400 = vld [vmem:[#allocation13 + $0x1f8] sm:$0xff]
    %v1401 = vld [vmem:[#allocation13 + $0x200] sm:$0xff]
    %v1402 = vld [vmem:[#allocation13 + $0x208] sm:$0xff]
    %v1403 = vld [vmem:[#allocation13 + $0x210] sm:$0xff]
    %v1404 = vld [vmem:[#allocation13 + $0x218] sm:$0xff]
    %v1405 = vld [vmem:[#allocation13 + $0x220] sm:$0xff]
    %v1406 = vld [vmem:[#allocation13 + $0x228] sm:$0xff]
    %v1407 = vld [vmem:[#allocation13 + $0x230] sm:$0xff]
    %v1408 = vld [vmem:[#allocation13 + $0x238] sm:$0xff]
    %v1409 = vld [vmem:[#allocation13 + $0x240] sm:$0xff]
    %v1410 = vld [vmem:[#allocation13 + $0x248] sm:$0xff]
    %v1411 = vld [vmem:[#allocation13 + $0x250] sm:$0xff]
    %v1412 = vld [vmem:[#allocation13 + $0x258] sm:$0xff]
    %v1413 = vld [vmem:[#allocation13 + $0x260] sm:$0xff]
    %v1414 = vld [vmem:[#allocation13 + $0x268] sm:$0xff]
    %v1415 = vld [vmem:[#allocation13 + $0x270] sm:$0xff]
    %v1416 = vld [vmem:[#allocation13 + $0x278] sm:$0xff]
    %v1417 = vld [vmem:[#allocation13 + $0x280] sm:$0xff]
    %v1418 = vld [vmem:[#allocation13 + $0x288] sm:$0xff]
    %v1419 = vld [vmem:[#allocation13 + $0x290] sm:$0xff]
    %v1420 = vld [vmem:[#allocation13 + $0x298] sm:$0xff]
    %v1421 = vld [vmem:[#allocation13 + $0x2a0] sm:$0xff]
    %v1422 = vld [vmem:[#allocation13 + $0x2a8] sm:$0xff]
    %v1423 = vld [vmem:[#allocation13 + $0x2b0] sm:$0xff]
    %v1424 = vld [vmem:[#allocation13 + $0x2b8] sm:$0xff]
    %v1425 = vld [vmem:[#allocation13 + $0x2c0] sm:$0xff]
    %v1426 = vld [vmem:[#allocation13 + $0x2c8] sm:$0xff]
    %v1427 = vld [vmem:[#allocation13 + $0x2d0] sm:$0xff]
    %v1428 = vld [vmem:[#allocation13 + $0x2d8] sm:$0xff]
    %v1429 = vld [vmem:[#allocation13 + $0x2e0] sm:$0xff]
    %v1430 = vld [vmem:[#allocation13 + $0x2e8] sm:$0xff]
    %v1431 = vld [vmem:[#allocation13 + $0x2f0] sm:$0xff]
    %v1432 = vld [vmem:[#allocation13 + $0x2f8] sm:$0xff]
    %v1433 = vld [vmem:[#allocation13 + $0x300] sm:$0xff]
    %v1434 = vld [vmem:[#allocation13 + $0x308] sm:$0xff]
    %v1435 = vld [vmem:[#allocation13 + $0x310] sm:$0xff]
    %v1436 = vld [vmem:[#allocation13 + $0x318] sm:$0xff]
    %v1437 = vld [vmem:[#allocation13 + $0x320] sm:$0xff]
    %v1438 = vld [vmem:[#allocation13 + $0x328] sm:$0xff]
    %v1439 = vld [vmem:[#allocation13 + $0x330] sm:$0xff]
    %v1440 = vld [vmem:[#allocation13 + $0x338] sm:$0xff]
    %v1441 = vld [vmem:[#allocation13 + $0x340] sm:$0xff]
    %v1442 = vld [vmem:[#allocation13 + $0x348] sm:$0xff]
    %v1443 = vld [vmem:[#allocation13 + $0x350] sm:$0xff]
    %v1444 = vld [vmem:[#allocation13 + $0x358] sm:$0xff]
    %v1445 = vld [vmem:[#allocation13 + $0x360] sm:$0xff]
    %v1446 = vld [vmem:[#allocation13 + $0x368] sm:$0xff]
    %v1447 = vld [vmem:[#allocation13 + $0x370] sm:$0xff]
    %v1448 = vld [vmem:[#allocation13 + $0x378] sm:$0xff]
    %v1449 = vld [vmem:[#allocation13 + $0x380] sm:$0xff]
    %v1450 = vld [vmem:[#allocation13 + $0x388] sm:$0xff]
    %v1451 = vld [vmem:[#allocation13 + $0x390] sm:$0xff]
    %v1452 = vld [vmem:[#allocation13 + $0x398] sm:$0xff]
    %v1453 = vld [vmem:[#allocation13 + $0x3a0] sm:$0xff]
    %v1454 = vld [vmem:[#allocation13 + $0x3a8] sm:$0xff]
    %v1455 = vld [vmem:[#allocation13 + $0x3b0] sm:$0xff]
    %v1456 = vld [vmem:[#allocation13 + $0x3b8] sm:$0xff]
    %v1457 = vld [vmem:[#allocation13 + $0x3c0] sm:$0xff]
    %v1458 = vld [vmem:[#allocation13 + $0x3c8] sm:$0xff]
    %v1459 = vld [vmem:[#allocation13 + $0x3d0] sm:$0xff]
    %v1460 = vld [vmem:[#allocation13 + $0x3d8] sm:$0xff]
    %v1461 = vld [vmem:[#allocation13 + $0x3e0] sm:$0xff]
    %v1462 = vld [vmem:[#allocation13 + $0x3e8] sm:$0xff]
    %v1463 = vld [vmem:[#allocation13 + $0x3f0] sm:$0xff]
    %v1464 = vld [vmem:[#allocation13 + $0x3f8] sm:$0xff]
    %v1465 = vld [vmem:[%s8] sm:$0xf]
    %v1467 = vperm.slane %v1465, 0
    %v1468 = vperm.slane %v1465, 1
    %v1469 = vperm.slane %v1465, 2
    %v1470 = vperm.slane %v1465, 3
    %v1603 = vunpack.c.l.b16 %v1337
    %v1604 = vunpack.c.h.b16 %v1337
    %v1605 = vunpack.c.l.b16 %v1338
    %v1606 = vunpack.c.h.b16 %v1338
    %v1607 = vunpack.c.l.b16 %v1339
    %v1608 = vunpack.c.h.b16 %v1339
    %v1609 = vunpack.c.l.b16 %v1340
    %v1610 = vunpack.c.h.b16 %v1340
    %v1611 = vunpack.c.l.b16 %v1341
    %v1612 = vunpack.c.h.b16 %v1341
    %v1613 = vunpack.c.l.b16 %v1342
    %v1614 = vunpack.c.h.b16 %v1342
    %v1615 = vunpack.c.l.b16 %v1343
    %v1616 = vunpack.c.h.b16 %v1343
    %v1617 = vunpack.c.l.b16 %v1344
    %v1618 = vunpack.c.h.b16 %v1344
    %v1619 = vunpack.c.l.b16 %v1345
    %v1620 = vunpack.c.h.b16 %v1345
    %v1621 = vunpack.c.l.b16 %v1346
    %v1622 = vunpack.c.h.b16 %v1346
    %v1623 = vunpack.c.l.b16 %v1347
    %v1624 = vunpack.c.h.b16 %v1347
    %v1625 = vunpack.c.l.b16 %v1348
    %v1626 = vunpack.c.h.b16 %v1348
    %v1627 = vunpack.c.l.b16 %v1349
    %v1628 = vunpack.c.h.b16 %v1349
    %v1629 = vunpack.c.l.b16 %v1350
    %v1630 = vunpack.c.h.b16 %v1350
    %v1631 = vunpack.c.l.b16 %v1351
    %v1632 = vunpack.c.h.b16 %v1351
    %v1633 = vunpack.c.l.b16 %v1352
    %v1634 = vunpack.c.h.b16 %v1352
    %v1635 = vunpack.c.l.b16 %v1353
    %v1636 = vunpack.c.h.b16 %v1353
    %v1637 = vunpack.c.l.b16 %v1354
    %v1638 = vunpack.c.h.b16 %v1354
    %v1639 = vunpack.c.l.b16 %v1355
    %v1640 = vunpack.c.h.b16 %v1355
    %v1641 = vunpack.c.l.b16 %v1356
    %v1642 = vunpack.c.h.b16 %v1356
    %v1643 = vunpack.c.l.b16 %v1357
    %v1644 = vunpack.c.h.b16 %v1357
    %v1645 = vunpack.c.l.b16 %v1358
    %v1646 = vunpack.c.h.b16 %v1358
    %v1647 = vunpack.c.l.b16 %v1359
    %v1648 = vunpack.c.h.b16 %v1359
    %v1649 = vunpack.c.l.b16 %v1360
    %v1650 = vunpack.c.h.b16 %v1360
    %v1651 = vunpack.c.l.b16 %v1361
    %v1652 = vunpack.c.h.b16 %v1361
    %v1653 = vunpack.c.l.b16 %v1362
    %v1654 = vunpack.c.h.b16 %v1362
    %v1655 = vunpack.c.l.b16 %v1363
    %v1656 = vunpack.c.h.b16 %v1363
    %v1657 = vunpack.c.l.b16 %v1364
    %v1658 = vunpack.c.h.b16 %v1364
    %v1659 = vunpack.c.l.b16 %v1365
    %v1660 = vunpack.c.h.b16 %v1365
    %v1661 = vunpack.c.l.b16 %v1366
    %v1662 = vunpack.c.h.b16 %v1366
    %v1663 = vunpack.c.l.b16 %v1367
    %v1664 = vunpack.c.h.b16 %v1367
    %v1665 = vunpack.c.l.b16 %v1368
    %v1666 = vunpack.c.h.b16 %v1368
    %v1667 = vunpack.c.l.b16 %v1369
    %v1668 = vunpack.c.h.b16 %v1369
    %v1669 = vunpack.c.l.b16 %v1370
    %v1670 = vunpack.c.h.b16 %v1370
    %v1671 = vunpack.c.l.b16 %v1371
    %v1672 = vunpack.c.h.b16 %v1371
    %v1673 = vunpack.c.l.b16 %v1372
    %v1674 = vunpack.c.h.b16 %v1372
    %v1675 = vunpack.c.l.b16 %v1373
    %v1676 = vunpack.c.h.b16 %v1373
    %v1677 = vunpack.c.l.b16 %v1374
    %v1678 = vunpack.c.h.b16 %v1374
    %v1679 = vunpack.c.l.b16 %v1375
    %v1680 = vunpack.c.h.b16 %v1375
    %v1681 = vunpack.c.l.b16 %v1376
    %v1682 = vunpack.c.h.b16 %v1376
    %v1683 = vunpack.c.l.b16 %v1377
    %v1684 = vunpack.c.h.b16 %v1377
    %v1685 = vunpack.c.l.b16 %v1378
    %v1686 = vunpack.c.h.b16 %v1378
    %v1687 = vunpack.c.l.b16 %v1379
    %v1688 = vunpack.c.h.b16 %v1379
    %v1689 = vunpack.c.l.b16 %v1380
    %v1690 = vunpack.c.h.b16 %v1380
    %v1691 = vunpack.c.l.b16 %v1381
    %v1692 = vunpack.c.h.b16 %v1381
    %v1693 = vunpack.c.l.b16 %v1382
    %v1694 = vunpack.c.h.b16 %v1382
    %v1695 = vunpack.c.l.b16 %v1383
    %v1696 = vunpack.c.h.b16 %v1383
    %v1697 = vunpack.c.l.b16 %v1384
    %v1698 = vunpack.c.h.b16 %v1384
    %v1699 = vunpack.c.l.b16 %v1385
    %v1700 = vunpack.c.h.b16 %v1385
    %v1701 = vunpack.c.l.b16 %v1386
    %v1702 = vunpack.c.h.b16 %v1386
    %v1703 = vunpack.c.l.b16 %v1387
    %v1704 = vunpack.c.h.b16 %v1387
    %v1705 = vunpack.c.l.b16 %v1388
    %v1706 = vunpack.c.h.b16 %v1388
    %v1707 = vunpack.c.l.b16 %v1389
    %v1708 = vunpack.c.h.b16 %v1389
    %v1709 = vunpack.c.l.b16 %v1390
    %v1710 = vunpack.c.h.b16 %v1390
    %v1711 = vunpack.c.l.b16 %v1391
    %v1712 = vunpack.c.h.b16 %v1391
    %v1713 = vunpack.c.l.b16 %v1392
    %v1714 = vunpack.c.h.b16 %v1392
    %v1715 = vunpack.c.l.b16 %v1393
    %v1716 = vunpack.c.h.b16 %v1393
    %v1717 = vunpack.c.l.b16 %v1394
    %v1718 = vunpack.c.h.b16 %v1394
    %v1719 = vunpack.c.l.b16 %v1395
    %v1720 = vunpack.c.h.b16 %v1395
    %v1721 = vunpack.c.l.b16 %v1396
    %v1722 = vunpack.c.h.b16 %v1396
    %v1723 = vunpack.c.l.b16 %v1397
    %v1724 = vunpack.c.h.b16 %v1397
    %v1725 = vunpack.c.l.b16 %v1398
    %v1726 = vunpack.c.h.b16 %v1398
    %v1727 = vunpack.c.l.b16 %v1399
    %v1728 = vunpack.c.h.b16 %v1399
    %v1729 = vunpack.c.l.b16 %v1400
    %v1730 = vunpack.c.h.b16 %v1400
    %v1731 = vunpack.c.l.b16 %v1401
    %v1732 = vunpack.c.h.b16 %v1401
    %v1733 = vunpack.c.l.b16 %v1402
    %v1734 = vunpack.c.h.b16 %v1402
    %v1735 = vunpack.c.l.b16 %v1403
    %v1736 = vunpack.c.h.b16 %v1403
    %v1737 = vunpack.c.l.b16 %v1404
    %v1738 = vunpack.c.h.b16 %v1404
    %v1739 = vunpack.c.l.b16 %v1405
    %v1740 = vunpack.c.h.b16 %v1405
    %v1741 = vunpack.c.l.b16 %v1406
    %v1742 = vunpack.c.h.b16 %v1406
    %v1743 = vunpack.c.l.b16 %v1407
    %v1744 = vunpack.c.h.b16 %v1407
    %v1745 = vunpack.c.l.b16 %v1408
    %v1746 = vunpack.c.h.b16 %v1408
    %v1747 = vunpack.c.l.b16 %v1409
    %v1748 = vunpack.c.h.b16 %v1409
    %v1749 = vunpack.c.l.b16 %v1410
    %v1750 = vunpack.c.h.b16 %v1410
    %v1751 = vunpack.c.l.b16 %v1411
    %v1752 = vunpack.c.h.b16 %v1411
    %v1753 = vunpack.c.l.b16 %v1412
    %v1754 = vunpack.c.h.b16 %v1412
    %v1755 = vunpack.c.l.b16 %v1413
    %v1756 = vunpack.c.h.b16 %v1413
    %v1757 = vunpack.c.l.b16 %v1414
    %v1758 = vunpack.c.h.b16 %v1414
    %v1759 = vunpack.c.l.b16 %v1415
    %v1760 = vunpack.c.h.b16 %v1415
    %v1761 = vunpack.c.l.b16 %v1416
    %v1762 = vunpack.c.h.b16 %v1416
    %v1763 = vunpack.c.l.b16 %v1417
    %v1764 = vunpack.c.h.b16 %v1417
    %v1765 = vunpack.c.l.b16 %v1418
    %v1766 = vunpack.c.h.b16 %v1418
    %v1767 = vunpack.c.l.b16 %v1419
    %v1768 = vunpack.c.h.b16 %v1419
    %v1769 = vunpack.c.l.b16 %v1420
    %v1770 = vunpack.c.h.b16 %v1420
    %v1771 = vunpack.c.l.b16 %v1421
    %v1772 = vunpack.c.h.b16 %v1421
    %v1773 = vunpack.c.l.b16 %v1422
    %v1774 = vunpack.c.h.b16 %v1422
    %v1775 = vunpack.c.l.b16 %v1423
    %v1776 = vunpack.c.h.b16 %v1423
    %v1777 = vunpack.c.l.b16 %v1424
    %v1778 = vunpack.c.h.b16 %v1424
    %v1779 = vunpack.c.l.b16 %v1425
    %v1780 = vunpack.c.h.b16 %v1425
    %v1781 = vunpack.c.l.b16 %v1426
    %v1782 = vunpack.c.h.b16 %v1426
    %v1783 = vunpack.c.l.b16 %v1427
    %v1784 = vunpack.c.h.b16 %v1427
    %v1785 = vunpack.c.l.b16 %v1428
    %v1786 = vunpack.c.h.b16 %v1428
    %v1787 = vunpack.c.l.b16 %v1429
    %v1788 = vunpack.c.h.b16 %v1429
    %v1789 = vunpack.c.l.b16 %v1430
    %v1790 = vunpack.c.h.b16 %v1430
    %v1791 = vunpack.c.l.b16 %v1431
    %v1792 = vunpack.c.h.b16 %v1431
    %v1793 = vunpack.c.l.b16 %v1432
    %v1794 = vunpack.c.h.b16 %v1432
    %v1795 = vunpack.c.l.b16 %v1433
    %v1796 = vunpack.c.h.b16 %v1433
    %v1797 = vunpack.c.l.b16 %v1434
    %v1798 = vunpack.c.h.b16 %v1434
    %v1799 = vunpack.c.l.b16 %v1435
    %v1800 = vunpack.c.h.b16 %v1435
    %v1801 = vunpack.c.l.b16 %v1436
    %v1802 = vunpack.c.h.b16 %v1436
    %v1803 = vunpack.c.l.b16 %v1437
    %v1804 = vunpack.c.h.b16 %v1437
    %v1805 = vunpack.c.l.b16 %v1438
    %v1806 = vunpack.c.h.b16 %v1438
    %v1807 = vunpack.c.l.b16 %v1439
    %v1808 = vunpack.c.h.b16 %v1439
    %v1809 = vunpack.c.l.b16 %v1440
    %v1810 = vunpack.c.h.b16 %v1440
    %v1811 = vunpack.c.l.b16 %v1441
    %v1812 = vunpack.c.h.b16 %v1441
    %v1813 = vunpack.c.l.b16 %v1442
    %v1814 = vunpack.c.h.b16 %v1442
    %v1815 = vunpack.c.l.b16 %v1443
    %v1816 = vunpack.c.h.b16 %v1443
    %v1817 = vunpack.c.l.b16 %v1444
    %v1818 = vunpack.c.h.b16 %v1444
    %v1819 = vunpack.c.l.b16 %v1445
    %v1820 = vunpack.c.h.b16 %v1445
    %v1821 = vunpack.c.l.b16 %v1446
    %v1822 = vunpack.c.h.b16 %v1446
    %v1823 = vunpack.c.l.b16 %v1447
    %v1824 = vunpack.c.h.b16 %v1447
    %v1825 = vunpack.c.l.b16 %v1448
    %v1826 = vunpack.c.h.b16 %v1448
    %v1827 = vunpack.c.l.b16 %v1449
    %v1828 = vunpack.c.h.b16 %v1449
    %v1829 = vunpack.c.l.b16 %v1450
    %v1830 = vunpack.c.h.b16 %v1450
    %v1831 = vunpack.c.l.b16 %v1451
    %v1832 = vunpack.c.h.b16 %v1451
    %v1833 = vunpack.c.l.b16 %v1452
    %v1834 = vunpack.c.h.b16 %v1452
    %v1835 = vunpack.c.l.b16 %v1453
    %v1836 = vunpack.c.h.b16 %v1453
    %v1837 = vunpack.c.l.b16 %v1454
    %v1838 = vunpack.c.h.b16 %v1454
    %v1839 = vunpack.c.l.b16 %v1455
    %v1840 = vunpack.c.h.b16 %v1455
    %v1841 = vunpack.c.l.b16 %v1456
    %v1842 = vunpack.c.h.b16 %v1456
    %v1843 = vunpack.c.l.b16 %v1457
    %v1844 = vunpack.c.h.b16 %v1457
    %v1845 = vunpack.c.l.b16 %v1458
    %v1846 = vunpack.c.h.b16 %v1458
    %v1847 = vunpack.c.l.b16 %v1459
    %v1848 = vunpack.c.h.b16 %v1459
    %v1849 = vunpack.c.l.b16 %v1460
    %v1850 = vunpack.c.h.b16 %v1460
    %v1851 = vunpack.c.l.b16 %v1461
    %v1852 = vunpack.c.h.b16 %v1461
    %v1853 = vunpack.c.l.b16 %v1462
    %v1854 = vunpack.c.h.b16 %v1462
    %v1855 = vunpack.c.l.b16 %v1463
    %v1856 = vunpack.c.h.b16 %v1463
    %v1857 = vunpack.c.l.b16 %v1464
    %v1858 = vunpack.c.h.b16 %v1464
    %v1859 = vpack.c.b16 %v1607, %v1603
    %v1860 = vpack.c.b16 %v1608, %v1604
    %v1861 = vpack.c.b16 %v1609, %v1605
    %v1862 = vpack.c.b16 %v1610, %v1606
    %v1863 = vpack.c.b16 %v1615, %v1611
    %v1864 = vpack.c.b16 %v1616, %v1612
    %v1865 = vpack.c.b16 %v1617, %v1613
    %v1866 = vpack.c.b16 %v1618, %v1614
    %v1867 = vpack.c.b16 %v1623, %v1619
    %v1868 = vpack.c.b16 %v1624, %v1620
    %v1869 = vpack.c.b16 %v1625, %v1621
    %v1870 = vpack.c.b16 %v1626, %v1622
    %v1871 = vpack.c.b16 %v1631, %v1627
    %v1872 = vpack.c.b16 %v1632, %v1628
    %v1873 = vpack.c.b16 %v1633, %v1629
    %v1874 = vpack.c.b16 %v1634, %v1630
    %v1875 = vpack.c.b16 %v1639, %v1635
    %v1876 = vpack.c.b16 %v1640, %v1636
    %v1877 = vpack.c.b16 %v1641, %v1637
    %v1878 = vpack.c.b16 %v1642, %v1638
    %v1879 = vpack.c.b16 %v1647, %v1643
    %v1880 = vpack.c.b16 %v1648, %v1644
    %v1881 = vpack.c.b16 %v1649, %v1645
    %v1882 = vpack.c.b16 %v1650, %v1646
    %v1883 = vpack.c.b16 %v1655, %v1651
    %v1884 = vpack.c.b16 %v1656, %v1652
    %v1885 = vpack.c.b16 %v1657, %v1653
    %v1886 = vpack.c.b16 %v1658, %v1654
    %v1887 = vpack.c.b16 %v1663, %v1659
    %v1888 = vpack.c.b16 %v1664, %v1660
    %v1889 = vpack.c.b16 %v1665, %v1661
    %v1890 = vpack.c.b16 %v1666, %v1662
    %v1891 = vpack.c.b16 %v1671, %v1667
    %v1892 = vpack.c.b16 %v1672, %v1668
    %v1893 = vpack.c.b16 %v1673, %v1669
    %v1894 = vpack.c.b16 %v1674, %v1670
    %v1895 = vpack.c.b16 %v1679, %v1675
    %v1896 = vpack.c.b16 %v1680, %v1676
    %v1897 = vpack.c.b16 %v1681, %v1677
    %v1898 = vpack.c.b16 %v1682, %v1678
    %v1899 = vpack.c.b16 %v1687, %v1683
    %v1900 = vpack.c.b16 %v1688, %v1684
    %v1901 = vpack.c.b16 %v1689, %v1685
    %v1902 = vpack.c.b16 %v1690, %v1686
    %v1903 = vpack.c.b16 %v1695, %v1691
    %v1904 = vpack.c.b16 %v1696, %v1692
    %v1905 = vpack.c.b16 %v1697, %v1693
    %v1906 = vpack.c.b16 %v1698, %v1694
    %v1907 = vpack.c.b16 %v1703, %v1699
    %v1908 = vpack.c.b16 %v1704, %v1700
    %v1909 = vpack.c.b16 %v1705, %v1701
    %v1910 = vpack.c.b16 %v1706, %v1702
    %v1911 = vpack.c.b16 %v1711, %v1707
    %v1912 = vpack.c.b16 %v1712, %v1708
    %v1913 = vpack.c.b16 %v1713, %v1709
    %v1914 = vpack.c.b16 %v1714, %v1710
    %v1915 = vpack.c.b16 %v1719, %v1715
    %v1916 = vpack.c.b16 %v1720, %v1716
    %v1917 = vpack.c.b16 %v1721, %v1717
    %v1918 = vpack.c.b16 %v1722, %v1718
    %v1919 = vpack.c.b16 %v1727, %v1723
    %v1920 = vpack.c.b16 %v1728, %v1724
    %v1921 = vpack.c.b16 %v1729, %v1725
    %v1922 = vpack.c.b16 %v1730, %v1726
    %v1923 = vpack.c.b16 %v1735, %v1731
    %v1924 = vpack.c.b16 %v1736, %v1732
    %v1925 = vpack.c.b16 %v1737, %v1733
    %v1926 = vpack.c.b16 %v1738, %v1734
    %v1927 = vpack.c.b16 %v1743, %v1739
    %v1928 = vpack.c.b16 %v1744, %v1740
    %v1929 = vpack.c.b16 %v1745, %v1741
    %v1930 = vpack.c.b16 %v1746, %v1742
    %v1931 = vpack.c.b16 %v1751, %v1747
    %v1932 = vpack.c.b16 %v1752, %v1748
    %v1933 = vpack.c.b16 %v1753, %v1749
    %v1934 = vpack.c.b16 %v1754, %v1750
    %v1935 = vpack.c.b16 %v1759, %v1755
    %v1936 = vpack.c.b16 %v1760, %v1756
    %v1937 = vpack.c.b16 %v1761, %v1757
    %v1938 = vpack.c.b16 %v1762, %v1758
    %v1939 = vpack.c.b16 %v1767, %v1763
    %v1940 = vpack.c.b16 %v1768, %v1764
    %v1941 = vpack.c.b16 %v1769, %v1765
    %v1942 = vpack.c.b16 %v1770, %v1766
    %v1943 = vpack.c.b16 %v1775, %v1771
    %v1944 = vpack.c.b16 %v1776, %v1772
    %v1945 = vpack.c.b16 %v1777, %v1773
    %v1946 = vpack.c.b16 %v1778, %v1774
    %v1947 = vpack.c.b16 %v1783, %v1779
    %v1948 = vpack.c.b16 %v1784, %v1780
    %v1949 = vpack.c.b16 %v1785, %v1781
    %v1950 = vpack.c.b16 %v1786, %v1782
    %v1951 = vpack.c.b16 %v1791, %v1787
    %v1952 = vpack.c.b16 %v1792, %v1788
    %v1953 = vpack.c.b16 %v1793, %v1789
    %v1954 = vpack.c.b16 %v1794, %v1790
    %v1955 = vpack.c.b16 %v1799, %v1795
    %v1956 = vpack.c.b16 %v1800, %v1796
    %v1957 = vpack.c.b16 %v1801, %v1797
    %v1958 = vpack.c.b16 %v1802, %v1798
    %v1959 = vpack.c.b16 %v1807, %v1803
    %v1960 = vpack.c.b16 %v1808, %v1804
    %v1961 = vpack.c.b16 %v1809, %v1805
    %v1962 = vpack.c.b16 %v1810, %v1806
    %v1963 = vpack.c.b16 %v1815, %v1811
    %v1964 = vpack.c.b16 %v1816, %v1812
    %v1965 = vpack.c.b16 %v1817, %v1813
    %v1966 = vpack.c.b16 %v1818, %v1814
    %v1967 = vpack.c.b16 %v1823, %v1819
    %v1968 = vpack.c.b16 %v1824, %v1820
    %v1969 = vpack.c.b16 %v1825, %v1821
    %v1970 = vpack.c.b16 %v1826, %v1822
    %v1971 = vpack.c.b16 %v1831, %v1827
    %v1972 = vpack.c.b16 %v1832, %v1828
    %v1973 = vpack.c.b16 %v1833, %v1829
    %v1974 = vpack.c.b16 %v1834, %v1830
    %v1975 = vpack.c.b16 %v1839, %v1835
    %v1976 = vpack.c.b16 %v1840, %v1836
    %v1977 = vpack.c.b16 %v1841, %v1837
    %v1978 = vpack.c.b16 %v1842, %v1838
    %v1979 = vpack.c.b16 %v1847, %v1843
    %v1980 = vpack.c.b16 %v1848, %v1844
    %v1981 = vpack.c.b16 %v1849, %v1845
    %v1982 = vpack.c.b16 %v1850, %v1846
    %v1983 = vpack.c.b16 %v1855, %v1851
    %v1984 = vpack.c.b16 %v1856, %v1852
    %v1985 = vpack.c.b16 %v1857, %v1853
    %v1986 = vpack.c.b16 %v1858, %v1854
    %2115 = vmatpush.bf16.msra.mxu0 %v1887
    %2116 = vmatpush.bf16.msra.mxu0 %v1883
    %2117 = vmatpush.bf16.msra.mxu0 %v1879
    %2118 = vmatpush.bf16.msra.mxu0 %v1875
    %2119 = vmatpush.bf16.msra.mxu0 %v1871
    %2120 = vmatpush.bf16.msra.mxu0 %v1867
    %2121 = vmatpush.bf16.msra.mxu0 %v1863
    %2122 = vmatpush.bf16.msra.mxu0 %v1859
    %2123 = vmatmul.bf16.gmra.mxu0 %v1333
    %v2124 = vpop.f32.mrf.mxu0
    %v2125 = vadd.f32 %v1467, %v2124
    %v2126 = vpop.f32.mrf.mxu0
    %2127 = vdwg.mxu0
    %2128 = vmatpush.bf16.msra.mxu0 %v1919
    %2129 = vmatpush.bf16.msra.mxu0 %v1915
    %2130 = vmatpush.bf16.msra.mxu0 %v1911
    %2131 = vmatpush.bf16.msra.mxu0 %v1907
    %2132 = vmatpush.bf16.msra.mxu0 %v1903
    %2133 = vmatpush.bf16.msra.mxu0 %v1899
    %2134 = vmatpush.bf16.msra.mxu0 %v1895
    %2135 = vmatpush.bf16.msra.mxu0 %v1891
    %2136 = vmatmul.bf16.gmra.mxu0 %v1334
    %v2137 = vpop.f32.mrf.mxu0
    %v2138 = vadd.f32 %v2125, %v2137
    %v2139 = vpop.f32.mrf.mxu0
    %2140 = vdwg.mxu0
    %2141 = vmatpush.bf16.msra.mxu0 %v1951
    %2142 = vmatpush.bf16.msra.mxu0 %v1947
    %2143 = vmatpush.bf16.msra.mxu0 %v1943
    %2144 = vmatpush.bf16.msra.mxu0 %v1939
    %2145 = vmatpush.bf16.msra.mxu0 %v1935
    %2146 = vmatpush.bf16.msra.mxu0 %v1931
    %2147 = vmatpush.bf16.msra.mxu0 %v1927
    %2148 = vmatpush.bf16.msra.mxu0 %v1923
    %2149 = vmatmul.bf16.gmra.mxu0 %v1335
    %v2150 = vpop.f32.mrf.mxu0
    %v2151 = vadd.f32 %v2138, %v2150
    %v2152 = vpop.f32.mrf.mxu0
    %2153 = vdwg.mxu0
    %2154 = vmatpush.bf16.msra.mxu0 %v1983
    %2155 = vmatpush.bf16.msra.mxu0 %v1979
    %2156 = vmatpush.bf16.msra.mxu0 %v1975
    %2157 = vmatpush.bf16.msra.mxu0 %v1971
    %2158 = vmatpush.bf16.msra.mxu0 %v1967
    %2159 = vmatpush.bf16.msra.mxu0 %v1963
    %2160 = vmatpush.bf16.msra.mxu0 %v1959
    %2161 = vmatpush.bf16.msra.mxu0 %v1955
    %2162 = vmatmul.bf16.gmra.mxu0 %v1336
    %v2163 = vpop.f32.mrf.mxu0
    %v2164 = vadd.f32 %v2151, %v2163
    %v2165 = vpop.f32.mrf.mxu0
    %2166 = vdwg.mxu0
    %2167 = vmatpush.bf16.msra.mxu0 %v1888
    %2168 = vmatpush.bf16.msra.mxu0 %v1884
    %2169 = vmatpush.bf16.msra.mxu0 %v1880
    %2170 = vmatpush.bf16.msra.mxu0 %v1876
    %2171 = vmatpush.bf16.msra.mxu0 %v1872
    %2172 = vmatpush.bf16.msra.mxu0 %v1868
    %2173 = vmatpush.bf16.msra.mxu0 %v1864
    %2174 = vmatpush.bf16.msra.mxu0 %v1860
    %2175 = vmatmul.bf16.gmra.mxu0 %v1333
    %v2176 = vpop.f32.mrf.mxu0
    %v2177 = vadd.f32 %v1468, %v2176
    %v2178 = vpop.f32.mrf.mxu0
    %2179 = vdwg.mxu0
    %2180 = vmatpush.bf16.msra.mxu0 %v1920
    %2181 = vmatpush.bf16.msra.mxu0 %v1916
    %2182 = vmatpush.bf16.msra.mxu0 %v1912
    %2183 = vmatpush.bf16.msra.mxu0 %v1908
    %2184 = vmatpush.bf16.msra.mxu0 %v1904
    %2185 = vmatpush.bf16.msra.mxu0 %v1900
    %2186 = vmatpush.bf16.msra.mxu0 %v1896
    %2187 = vmatpush.bf16.msra.mxu0 %v1892
    %2188 = vmatmul.bf16.gmra.mxu0 %v1334
    %v2189 = vpop.f32.mrf.mxu0
    %v2190 = vadd.f32 %v2177, %v2189
    %v2191 = vpop.f32.mrf.mxu0
    %2192 = vdwg.mxu0
    %2193 = vmatpush.bf16.msra.mxu0 %v1952
    %2194 = vmatpush.bf16.msra.mxu0 %v1948
    %2195 = vmatpush.bf16.msra.mxu0 %v1944
    %2196 = vmatpush.bf16.msra.mxu0 %v1940
    %2197 = vmatpush.bf16.msra.mxu0 %v1936
    %2198 = vmatpush.bf16.msra.mxu0 %v1932
    %2199 = vmatpush.bf16.msra.mxu0 %v1928
    %2200 = vmatpush.bf16.msra.mxu0 %v1924
    %2201 = vmatmul.bf16.gmra.mxu0 %v1335
    %v2202 = vpop.f32.mrf.mxu0
    %v2203 = vadd.f32 %v2190, %v2202
    %v2204 = vpop.f32.mrf.mxu0
    %2205 = vdwg.mxu0
    %2206 = vmatpush.bf16.msra.mxu0 %v1984
    %2207 = vmatpush.bf16.msra.mxu0 %v1980
    %2208 = vmatpush.bf16.msra.mxu0 %v1976
    %2209 = vmatpush.bf16.msra.mxu0 %v1972
    %2210 = vmatpush.bf16.msra.mxu0 %v1968
    %2211 = vmatpush.bf16.msra.mxu0 %v1964
    %2212 = vmatpush.bf16.msra.mxu0 %v1960
    %2213 = vmatpush.bf16.msra.mxu0 %v1956
    %2214 = vmatmul.bf16.gmra.mxu0 %v1336
    %v2215 = vpop.f32.mrf.mxu0
    %v2216 = vadd.f32 %v2203, %v2215
    %v2217 = vpop.f32.mrf.mxu0
    %2218 = vdwg.mxu0
    %2219 = vmatpush.bf16.msra.mxu0 %v1889
    %2220 = vmatpush.bf16.msra.mxu0 %v1885
    %2221 = vmatpush.bf16.msra.mxu0 %v1881
    %2222 = vmatpush.bf16.msra.mxu0 %v1877
    %2223 = vmatpush.bf16.msra.mxu0 %v1873
    %2224 = vmatpush.bf16.msra.mxu0 %v1869
    %2225 = vmatpush.bf16.msra.mxu0 %v1865
    %2226 = vmatpush.bf16.msra.mxu0 %v1861
    %2227 = vmatmul.bf16.gmra.mxu0 %v1333
    %v2228 = vpop.f32.mrf.mxu0
    %v2229 = vadd.f32 %v1469, %v2228
    %v2230 = vpop.f32.mrf.mxu0
    %2231 = vdwg.mxu0
    %2232 = vmatpush.bf16.msra.mxu0 %v1921
    %2233 = vmatpush.bf16.msra.mxu0 %v1917
    %2234 = vmatpush.bf16.msra.mxu0 %v1913
    %2235 = vmatpush.bf16.msra.mxu0 %v1909
    %2236 = vmatpush.bf16.msra.mxu0 %v1905
    %2237 = vmatpush.bf16.msra.mxu0 %v1901
    %2238 = vmatpush.bf16.msra.mxu0 %v1897
    %2239 = vmatpush.bf16.msra.mxu0 %v1893
    %2240 = vmatmul.bf16.gmra.mxu0 %v1334
    %v2241 = vpop.f32.mrf.mxu0
    %v2242 = vadd.f32 %v2229, %v2241
    %v2243 = vpop.f32.mrf.mxu0
    %2244 = vdwg.mxu0
    %2245 = vmatpush.bf16.msra.mxu0 %v1953
    %2246 = vmatpush.bf16.msra.mxu0 %v1949
    %2247 = vmatpush.bf16.msra.mxu0 %v1945
    %2248 = vmatpush.bf16.msra.mxu0 %v1941
    %2249 = vmatpush.bf16.msra.mxu0 %v1937
    %2250 = vmatpush.bf16.msra.mxu0 %v1933
    %2251 = vmatpush.bf16.msra.mxu0 %v1929
    %2252 = vmatpush.bf16.msra.mxu0 %v1925
    %2253 = vmatmul.bf16.gmra.mxu0 %v1335
    %v2254 = vpop.f32.mrf.mxu0
    %v2255 = vadd.f32 %v2242, %v2254
    %v2256 = vpop.f32.mrf.mxu0
    %2257 = vdwg.mxu0
    %2258 = vmatpush.bf16.msra.mxu0 %v1985
    %2259 = vmatpush.bf16.msra.mxu0 %v1981
    %2260 = vmatpush.bf16.msra.mxu0 %v1977
    %2261 = vmatpush.bf16.msra.mxu0 %v1973
    %2262 = vmatpush.bf16.msra.mxu0 %v1969
    %2263 = vmatpush.bf16.msra.mxu0 %v1965
    %2264 = vmatpush.bf16.msra.mxu0 %v1961
    %2265 = vmatpush.bf16.msra.mxu0 %v1957
    %2266 = vmatmul.bf16.gmra.mxu0 %v1336
    %v2267 = vpop.f32.mrf.mxu0
    %v2268 = vadd.f32 %v2255, %v2267
    %v2269 = vpop.f32.mrf.mxu0
    %2270 = vdwg.mxu0
    %2271 = vmatpush.bf16.msra.mxu0 %v1890
    %2272 = vmatpush.bf16.msra.mxu0 %v1886
    %2273 = vmatpush.bf16.msra.mxu0 %v1882
    %2274 = vmatpush.bf16.msra.mxu0 %v1878
    %2275 = vmatpush.bf16.msra.mxu0 %v1874
    %2276 = vmatpush.bf16.msra.mxu0 %v1870
    %2277 = vmatpush.bf16.msra.mxu0 %v1866
    %2278 = vmatpush.bf16.msra.mxu0 %v1862
    %2279 = vmatmul.bf16.gmra.mxu0 %v1333
    %v2280 = vpop.f32.mrf.mxu0
    %v2281 = vadd.f32 %v1470, %v2280
    %v2282 = vpop.f32.mrf.mxu0
    %2283 = vdwg.mxu0
    %2284 = vmatpush.bf16.msra.mxu0 %v1922
    %2285 = vmatpush.bf16.msra.mxu0 %v1918
    %2286 = vmatpush.bf16.msra.mxu0 %v1914
    %2287 = vmatpush.bf16.msra.mxu0 %v1910
    %2288 = vmatpush.bf16.msra.mxu0 %v1906
    %2289 = vmatpush.bf16.msra.mxu0 %v1902
    %2290 = vmatpush.bf16.msra.mxu0 %v1898
    %2291 = vmatpush.bf16.msra.mxu0 %v1894
    %2292 = vmatmul.bf16.gmra.mxu0 %v1334
    %v2293 = vpop.f32.mrf.mxu0
    %v2294 = vadd.f32 %v2281, %v2293
    %v2295 = vpop.f32.mrf.mxu0
    %2296 = vdwg.mxu0
    %2297 = vmatpush.bf16.msra.mxu0 %v1954
    %2298 = vmatpush.bf16.msra.mxu0 %v1950
    %2299 = vmatpush.bf16.msra.mxu0 %v1946
    %2300 = vmatpush.bf16.msra.mxu0 %v1942
    %2301 = vmatpush.bf16.msra.mxu0 %v1938
    %2302 = vmatpush.bf16.msra.mxu0 %v1934
    %2303 = vmatpush.bf16.msra.mxu0 %v1930
    %2304 = vmatpush.bf16.msra.mxu0 %v1926
    %2305 = vmatmul.bf16.gmra.mxu0 %v1335
    %v2306 = vpop.f32.mrf.mxu0
    %v2307 = vadd.f32 %v2294, %v2306
    %v2308 = vpop.f32.mrf.mxu0
    %2309 = vdwg.mxu0
    %2310 = vmatpush.bf16.msra.mxu0 %v1986
    %2311 = vmatpush.bf16.msra.mxu0 %v1982
    %2312 = vmatpush.bf16.msra.mxu0 %v1978
    %2313 = vmatpush.bf16.msra.mxu0 %v1974
    %2314 = vmatpush.bf16.msra.mxu0 %v1970
    %2315 = vmatpush.bf16.msra.mxu0 %v1966
    %2316 = vmatpush.bf16.msra.mxu0 %v1962
    %2317 = vmatpush.bf16.msra.mxu0 %v1958
    %2318 = vmatmul.bf16.gmra.mxu0 %v1336
    %v2319 = vpop.f32.mrf.mxu0
    %v2320 = vadd.f32 %v2307, %v2319
    %v2321 = vpop.f32.mrf.mxu0
    %2322 = vdwg.mxu0
    %v2323 = vmax.f32 %v2164, 0.0
    %v2324 = vmax.f32 %v2216, 0.0
    %v2325 = vmax.f32 %v2268, 0.0
    %v2326 = vmax.f32 %v2320, 0.0
    %v2327 = vld [vmem:[#allocation14] sm:$0xf]
    %v2329 = vperm.slane %v2327, 0
    %v2330 = vperm.slane %v2327, 1
    %v2331 = vperm.slane %v2327, 2
    %v2332 = vperm.slane %v2327, 3
    %v2337 = vmul.f32 %v2323, %v2329
    %v2338 = vmul.f32 %v2324, %v2330
    %v2339 = vmul.f32 %v2325, %v2331
    %v2340 = vmul.f32 %v2326, %v2332
    %v2341 = vadd.f32 %v2337, %v2338
    %v2342 = vadd.f32 %v2341, %v2339
    %v2343 = vadd.f32 %v2342, %v2340
    %2344 = vadd.xlane.f32.xlu0 %v2343
    %v2345 = vpop.xlane.xlu0 %2344
    %v2346 = vld [vmem:[#allocation2] sm:$0x1]
    %v2348 = vperm.slane %v2346, 0
    %v2350 = vadd.f32 %v2345, %v2348
    %vm2351 = vcmask 7168
    %2352 = vst.msk [vmem:[%s11] sm:$0xff] %vm2351, %v2350
    // Predicated region
    $region78: #{tpu_custom_call.1} parent=1 // pred_check
      _
    $region79: #{tpu_custom_call.1} parent=1 // pred_check_branch
      %2354 = sbr.rel (0) target = $region81
    $region80: #{tpu_custom_call.1} parent=1 // pred_region
      _
    $region81: #{tpu_custom_call.1} parent=1 // pred_fallthru
      _
    // Predicated region
    $region82: #{tpu_custom_call.1} parent=1 // pred_check
      _
    $region83: #{tpu_custom_call.1} parent=1 // pred_check_branch
      %2356 = sbr.rel (0) target = $region85
    $region84: #{tpu_custom_call.1} parent=1 // pred_region
      _
    $region85: #{tpu_custom_call.1} parent=1 // pred_fallthru
      _
    %2357 = vsyncpa [#allocation4], 1
    %2358 = vsyncpa [#allocation6], 1
    %2359 = vsyncpa [#allocation9], 1
    %2360 = vsyncpa [#allocation12], 1
    %2361 = vsyncpa [#allocation15], 1

</llo_original>
